<compile_context>
chip_gen: v5e
topology: v5e:2x2
jax: 0.10.0
libtpu: 0.0.40
codegen_flags: <defaults>
</compile_context>

<pallas_src>
import functools

import jax
import jax.numpy as jnp
from jax.experimental import pallas as pl
from jax.experimental.pallas import tpu as pltpu

EMBED_DIMS = (24, 48, 96, 48, 24)
PATCH_SIZE = 4
MACRO_PATCH = 16                      # 4 (patch_embed) * 2 (enc_down1) * 2 (enc_down2)
FEAT_DIM = sum(EMBED_DIMS[:3])        # 168 (do_multiscale=True)
PROJ_HIDDEN = 1024
MAX_TILE_M = 1024                     # rows of 16x16 patches per grid step


def _round_up(x, m):
    return (x + m - 1) // m * m


# ----------------------------- Pallas kernels ------------------------------

def _enc_pool_kernel(x_ref, w_ref, b_ref, o_ref, *, m_valid, tile_m):
    # Fused encoder (single pre-composed conv-as-matmul) + AdaptiveAvgPool2d(1).
    #   x_ref : (1, tile_m, K)   patch vectors of one image (zero-padded rows)
    #   w_ref : (K, 168)         pre-composed encoder weight (bf16 or f32)
    #   b_ref : (1, 168)         pre-composed encoder bias (f32)
    #   o_ref : (1, 1, 168)      per-image pooled mean, accumulated over tiles
    t = pl.program_id(1)
    nt = pl.num_programs(1)

    @pl.when(t == 0)
    def _init():
        o_ref[...] = jnp.zeros_like(o_ref)

    feat = jnp.dot(x_ref[0], w_ref[...], preferred_element_type=jnp.float32)
    # mask rows past the true number of spatial positions (zero-padded tail).
    rows = jax.lax.broadcasted_iota(jnp.int32, feat.shape, 0) + t * tile_m
    feat = jnp.where(rows < m_valid, feat, 0.0)
    o_ref[...] += jnp.sum(feat, axis=0, keepdims=True)[None]

    @pl.when(t == nt - 1)
    def _finalize():
        # mean over the true HW positions; bias added once here (not per row).
        o_ref[...] = o_ref[...] * (1.0 / m_valid) + b_ref[...][None]


def encoder_pool(patches, w, b, *, m_valid, tile_m):
    # patches: (B, m_pad, K) with m_pad % tile_m == 0 -> pooled (B, 168) f32.
    B, m_pad, K = patches.shape
    f_dim = w.shape[1]
    n_tiles = m_pad // tile_m
    in_item = patches.dtype.itemsize
    w_item = w.dtype.itemsize
    blk_bytes = tile_m * K * in_item + K * f_dim * w_item + 2 * f_dim * 4
    cost = pl.CostEstimate(
        flops=2 * B * m_pad * K * f_dim,
        transcendentals=0,
        bytes_accessed=B * m_pad * K * in_item + K * f_dim * w_item + B * f_dim * 4,
    )
    out = pl.pallas_call(
        functools.partial(_enc_pool_kernel, m_valid=m_valid, tile_m=tile_m),
        out_shape=jax.ShapeDtypeStruct((B, 1, f_dim), jnp.float32),
        grid=(B, n_tiles),
        in_specs=[
            pl.BlockSpec((1, tile_m, K), lambda bb, tt: (bb, tt, 0)),
            pl.BlockSpec((K, f_dim), lambda bb, tt: (0, 0)),
            pl.BlockSpec((1, f_dim), lambda bb, tt: (0, 0)),
        ],
        out_specs=pl.BlockSpec((1, 1, f_dim), lambda bb, tt: (bb, 0, 0)),
        compiler_params=pltpu.CompilerParams(
            dimension_semantics=("parallel", "arbitrary"),
            vmem_limit_bytes=int(min(64 << 20, (8 << 20) + 4 * blk_bytes)),
        ),
        cost_estimate=cost,
    )(patches, w, b)
    return out[:, 0, :]


def _erf(x):
    # float32-accurate erf (Abramowitz & Stegun 7.1.26, |err| < 1.5e-7), built
    # from exp only so it lowers cleanly in Mosaic.  PyTorch nn.GELU() default
    # is the exact erf form; this is a <=1.5e-7 approximation of it.
    p = 0.3275911
    a1, a2, a3, a4, a5 = (0.254829592, -0.284496736, 1.421413741,
                          -1.453152027, 1.061405429)
    s = jnp.where(x >= 0.0, 1.0, -1.0)
    ax = jnp.abs(x)
    t = 1.0 / (1.0 + p * ax)
    poly = ((((a5 * t + a4) * t + a3) * t + a2) * t + a1) * t
    return s * (1.0 - poly * jnp.exp(-ax * ax))


def _head_kernel(p_ref, w1_ref, b1_ref, w2_ref, b2_ref, o_ref):
    # CQA.vectorize + CQA.proj (pooling already done in the encoder kernel):
    #   F.normalize(dim=-1) -> Linear(168,1024) -> GELU (exact erf form)
    #   -> [Dropout(0.1): identity at inference] -> Linear(1024, out_channels)
    pooled = p_ref[...]                                        # (B, 168) f32
    ssq = jnp.sum(pooled * pooled, axis=-1, keepdims=True)
    z = pooled * jax.lax.rsqrt(jnp.maximum(ssq, 1e-24))        # eps=1e-12 on the norm
    h = jnp.dot(z, w1_ref[...], preferred_element_type=jnp.float32) + b1_ref[...]
    h = 0.5 * h * (1.0 + _erf(h * 0.7071067811865476))
    o_ref[...] = (
        jnp.dot(h, w2_ref[...], preferred_element_type=jnp.float32) + b2_ref[...]
    )


def head(pooled, w1, b1, w2, b2):
    B, f_dim = pooled.shape
    hid = w1.shape[1]
    o_dim = w2.shape[1]
    blk_bytes = (B * f_dim + f_dim * hid + hid + hid * o_dim + o_dim + B * o_dim) * 4
    return pl.pallas_call(
        _head_kernel,
        out_shape=jax.ShapeDtypeStruct((B, o_dim), jnp.float32),
        grid=(1,),
        in_specs=[
            pl.BlockSpec((B, f_dim), lambda i: (0, 0)),
            pl.BlockSpec((f_dim, hid), lambda i: (0, 0)),
            pl.BlockSpec((1, hid), lambda i: (0, 0)),
            pl.BlockSpec((hid, o_dim), lambda i: (0, 0)),
            pl.BlockSpec((1, o_dim), lambda i: (0, 0)),
        ],
        out_specs=pl.BlockSpec((B, o_dim), lambda i: (0, 0)),
        compiler_params=pltpu.CompilerParams(
            dimension_semantics=("arbitrary",),
            vmem_limit_bytes=int(min(64 << 20, (8 << 20) + 4 * blk_bytes)),
        ),
        cost_estimate=pl.CostEstimate(
            flops=2 * B * (f_dim * hid + hid * o_dim),
            transcendentals=B * hid,
            bytes_accessed=blk_bytes,
        ),
    )(pooled, w1, b1, w2, b2)


# ------------------------------ JAX-side glue -------------------------------

def _s2d(x, k):
    # NHWC -> (B, H/k * W/k, k*k*C) patches, row-major over (kh, kw, C).
    B, H, W, C = x.shape
    x = x.reshape(B, H // k, k, W // k, k, C)
    x = jnp.transpose(x, (0, 1, 3, 2, 4, 5))
    return x.reshape(B, (H // k) * (W // k), k * k * C)


def _conv_w_to_mm(w):
    # PyTorch conv weight (out, in, kh, kw) -> (kh*kw*in, out), matching the
    # (kh, kw, C) patch ordering produced by _s2d.
    o, i, kh, kw = w.shape
    return jnp.transpose(w, (2, 3, 1, 0)).reshape(kh * kw * i, o)


def _mm_hp(a, b):
    # host/XLA-side matmul at full f32 precision (param precompose + reference)
    return jnp.matmul(a, b, precision=jax.lax.Precision.HIGHEST)


def pad_image(x_nhwc, patch_size):
    # CQA.pad_image: reflect-pad H/W (bottom/right) up to a multiple of patch_size.
    h, w = x_nhwc.shape[1], x_nhwc.shape[2]
    ph = (patch_size - h % patch_size) % patch_size
    pw = (patch_size - w % patch_size) % patch_size
    if ph > 0 or pw > 0:
        x_nhwc = jnp.pad(x_nhwc, ((0, 0), (0, ph), (0, pw), (0, 0)), mode="reflect")
    return x_nhwc


def _encoder_chain_feat(x, raw, with_bias):
    # Staged patch_embed -> enc_down1 -> enc_down2 on a batch of 16x16 patches,
    # returning the 168-channel multiscale feature each patch produces.
    # enc_layer1/enc_layer2/neck are identity stand-ins, so this is affine in x.
    N = x.shape[0]

    def b_(v):
        return v if with_bias else jnp.zeros_like(v)

    p = _s2d(x, PATCH_SIZE)
    s1 = (_mm_hp(p, raw["pe_w"]) + b_(raw["pe_b"])).reshape(N, 4, 4, EMBED_DIMS[0])
    p = _s2d(s1, 2)
    s2 = (_mm_hp(p, raw["d1_w"]) + b_(raw["d1_b"])).reshape(N, 2, 2, EMBED_DIMS[1])
    p = _s2d(s2, 2)
    y = (_mm_hp(p, raw["d2_w"]) + b_(raw["d2_b"])).reshape(N, EMBED_DIMS[2])
    # nearest (floor) interpolation of s1/s2 onto the 1/16 grid samples the
    # top-left element of each 16x16 patch's sub-grid.
    return jnp.concatenate([s1[:, 0, 0, :], s2[:, 0, 0, :], y], axis=-1)


def precompose_encoder(raw, in_channels):
    # Fold the (linear) encoder + multiscale sampling + concat into a single
    # (16*16*in_ch, 168) affine map: probe the linear part with the identity
    # basis and the bias with a zero patch.
    # TODO(synk): only valid while enc_layer1/enc_layer2/neck are identity
    # stand-ins (their windowed-attention definitions are not provided);
    # revert to staged kernels when the real blocks land.
    K = MACRO_PATCH * MACRO_PATCH * in_channels
    basis = jnp.eye(K, dtype=jnp.float32).reshape(K, MACRO_PATCH, MACRO_PATCH, in_channels)
    w = _encoder_chain_feat(basis, raw, with_bias=False)                      # (K, 168)
    b = _encoder_chain_feat(
        jnp.zeros((1, MACRO_PATCH, MACRO_PATCH, in_channels), jnp.float32),
        raw, with_bias=True)                                                  # (1, 168)
    return w, b


def prepare_params(raw, in_channels=1, compute_dtype=jnp.bfloat16):
    # Kernel-ready params: bf16 encoder matmul operands (f32 accumulation on
    # the MXU), f32 bias, f32 head.
    enc_w, enc_b = precompose_encoder(raw, in_channels)
    return {
        "enc_w": enc_w.astype(compute_dtype),
        "enc_b": enc_b.astype(jnp.float32),
        "proj_w1": raw["proj_w1"], "proj_b1": raw["proj_b1"],
        "proj_w2": raw["proj_w2"], "proj_b2": raw["proj_b2"],
    }


def cqa_forward(x_nchw, params, tile_m=None):
    # x_nchw: (B, in_channels, H, W) -- PyTorch layout at the API boundary.
    x = jnp.transpose(x_nchw, (0, 2, 3, 1))                        # -> NHWC
    x = pad_image(x, PATCH_SIZE)
    B, H, W, Cin = x.shape
    if H % MACRO_PATCH or W % MACRO_PATCH:
        # Same restriction the staged implementation had (each stride-2 stage
        # needs an even input); reflect-padding only guarantees multiples of 4.
        raise ValueError(f"H, W after pad_image must be multiples of {MACRO_PATCH}; got {(H, W)}")
    h3, w3 = H // MACRO_PATCH, W // MACRO_PATCH
    m_img = h3 * w3
    K = MACRO_PATCH * MACRO_PATCH * Cin

    # Single space-to-depth (k=16) of the raw input -- the only remaining
    # layout op; all per-stage s2d/transpose/concat HBM round trips are gone.
    p = x.reshape(B, h3, MACRO_PATCH, w3, MACRO_PATCH, Cin)
    p = jnp.transpose(p, (0, 1, 3, 2, 4, 5)).reshape(B, m_img, K)

    if tile_m is None:
        tile_m = min(MAX_TILE_M, _round_up(m_img, 16))
    tile_m = max(16, _round_up(tile_m, 16))
    m_pad = _round_up(m_img, tile_m)
    if m_pad != m_img:
        p = jnp.pad(p, ((0, 0), (0, m_pad - m_img), (0, 0)))
    p = p.astype(params["enc_w"].dtype)

    pooled = encoder_pool(p, params["enc_w"], params["enc_b"],
                          m_valid=m_img, tile_m=tile_m)            # (B, 168) f32
    return head(pooled, params["proj_w1"], params["proj_b1"],
                params["proj_w2"], params["proj_b2"])              # (B, out_channels)


def init_params(key, in_channels=1, out_channels=1):
    ks = jax.random.split(key, 10)

    def w(k, shape, scale=0.02):
        return scale * jax.random.normal(k, shape, dtype=jnp.float32)

    return {
        "pe_w": _conv_w_to_mm(w(ks[0], (EMBED_DIMS[0], in_channels, 4, 4))),
        "pe_b": w(ks[1], (1, EMBED_DIMS[0])),
        "d1_w": _conv_w_to_mm(w(ks[2], (EMBED_DIMS[1], EMBED_DIMS[0], 2, 2))),
        "d1_b": w(ks[3], (1, EMBED_DIMS[1])),
        "d2_w": _conv_w_to_mm(w(ks[4], (EMBED_DIMS[2], EMBED_DIMS[1], 2, 2))),
        "d2_b": w(ks[5], (1, EMBED_DIMS[2])),
        "proj_w1": w(ks[6], (FEAT_DIM, PROJ_HIDDEN)),
        "proj_b1": w(ks[7], (1, PROJ_HIDDEN)),
        "proj_w2": w(ks[8], (PROJ_HIDDEN, out_channels)),
        "proj_b2": w(ks[9], (1, out_channels)),
    }


def cqa_forward_ref(x_nchw, raw):
    # Pure-JAX staged reference (no Pallas, no weight pre-composition);
    # mirrors the PyTorch graph with identity enc_layer/neck stand-ins.
    x = pad_image(jnp.transpose(x_nchw, (0, 2, 3, 1)), PATCH_SIZE)
    B, H, W, _ = x.shape
    h1, w1 = H // 4, W // 4
    s1 = (_mm_hp(_s2d(x, 4), raw["pe_w"]) + raw["pe_b"]).reshape(B, h1, w1, EMBED_DIMS[0])
    h2, w2 = h1 // 2, w1 // 2
    s2 = (_mm_hp(_s2d(s1, 2), raw["d1_w"]) + raw["d1_b"]).reshape(B, h2, w2, EMBED_DIMS[1])
    h3, w3 = h2 // 2, w2 // 2
    y = (_mm_hp(_s2d(s2, 2), raw["d2_w"]) + raw["d2_b"]).reshape(B, h3, w3, EMBED_DIMS[2])
    s1i = s1[:, :: (h1 // h3), :: (w1 // w3), :]
    s2i = s2[:, :: (h2 // h3), :: (w2 // w3), :]
    feat = jnp.concatenate([s1i, s2i, y], axis=-1)
    pooled = feat.reshape(B, -1, FEAT_DIM).mean(axis=1)
    z = pooled * jax.lax.rsqrt(jnp.maximum(jnp.sum(pooled * pooled, -1, keepdims=True), 1e-24))
    h = _mm_hp(z, raw["proj_w1"]) + raw["proj_b1"]
    h = 0.5 * h * (1.0 + _erf(h * 0.7071067811865476))
    return _mm_hp(h, raw["proj_w2"]) + raw["proj_b2"]


if __name__ == "__main__":
    key = jax.random.PRNGKey(0)
    kx, kp = jax.random.split(key)
    # in_channels=1 per the module defaults; 64x64 -> 4x4 grid of 16x16 patches.
    x = jax.random.normal(kx, (2, 1, 64, 64), dtype=jnp.float32)   # NCHW
    raw = init_params(kp, in_channels=1, out_channels=1)

    fwd = jax.jit(cqa_forward, static_argnames=("tile_m",))
    ref = jax.block_until_ready(cqa_forward_ref(x, raw))

    # f32 fused-kernel path vs. pure-JAX staged reference (structural check).
    params_f32 = prepare_params(raw, in_channels=1, compute_dtype=jnp.float32)
    out_f32 = jax.block_until_ready(fwd(x, params_f32))
    err = float(jnp.max(jnp.abs(out_f32 - ref)))
    assert err < 2e-3, f"f32 fused kernel mismatch vs staged reference: {err}"

    # default path: bf16 encoder operands, f32 accumulation, f32 head.
    params = prepare_params(raw, in_channels=1)
    out = jax.block_until_ready(fwd(x, params))
    assert out.shape == (2, 1) and out.dtype == jnp.float32
    err_bf16 = float(jnp.max(jnp.abs(out - ref)))
    assert err_bf16 < 5e-3, f"bf16 path deviates from reference: {err_bf16}"

    # exercise multi-tile accumulation + row masking (m_img=25, tile_m=16 -> 2 tiles).
    x2 = jax.random.normal(jax.random.PRNGKey(1), (1, 1, 80, 80), dtype=jnp.float32)
    out2 = jax.block_until_ready(fwd(x2, params, tile_m=16))
    err2 = float(jnp.max(jnp.abs(out2 - cqa_forward_ref(x2, raw))))
    assert err2 < 5e-3, f"multi-tile/masked path mismatch: {err2}"

    print("KERNEL_OK")
</pallas_src>

<mosaic_0001>
module attributes {stable_mosaic.version = 11 : i64} {
  func.func @_enc_pool_kernel(%arg0: i32, %arg1: i32, %arg2: memref<1x16x256xf32, #tpu.memory_space<vmem>>, %arg3: memref<256x168xf32, #tpu.memory_space<vmem>>, %arg4: memref<1x168xf32, #tpu.memory_space<vmem>>, %arg5: memref<1x1x168xf32, #tpu.memory_space<vmem>>) attributes {dimension_semantics = [#tpu.dimension_semantics<parallel>, #tpu.dimension_semantics<arbitrary>], iteration_bounds = array<i64: 2, 1>, scalar_prefetch = 0 : i64, scratch_operands = 0 : i64, tpu.core_type = #tpu.core_type<tc>, window_params = [{transform_indices = @transform_0, window_bounds = array<i64: 1, 16, 256>}, {pipeline_mode = #tpu.pipeline_mode<synchronous>, transform_indices = @transform_1, window_bounds = array<i64: 256, 168>}, {pipeline_mode = #tpu.pipeline_mode<synchronous>, transform_indices = @transform_2, window_bounds = array<i64: 1, 168>}, {transform_indices = @transform_3, window_bounds = array<i64: 1, 1, 168>}]} {
    %c0_i32 = arith.constant 0 : i32
    %0 = arith.cmpi eq, %arg1, %c0_i32 : i32
    %1 = arith.extui %0 : i1 to i32
    %c0_i32_0 = arith.constant 0 : i32
    %2 = arith.cmpi ne, %1, %c0_i32_0 : i32
    scf.if %2 {
      %cst_16 = arith.constant 0.000000e+00 : f32
      %24 = vector.broadcast %cst_16 : f32 to vector<1x1x168xf32>
      %c0_17 = arith.constant 0 : index
      %c0_18 = arith.constant 0 : index
      %c0_19 = arith.constant 0 : index
      %25 = vector.load %arg5[%c0_17, %c0_18, %c0_19] : memref<1x1x168xf32, #tpu.memory_space<vmem>>, vector<1x1x168xf32>
      tpu.vector_store %arg5[%c0_17, %c0_18, %c0_19], %24 {strides = array<i32>} : memref<1x1x168xf32, #tpu.memory_space<vmem>>, vector<1x1x168xf32>,
    } else {
    }
    %c0 = arith.constant 0 : index
    %c0_1 = arith.constant 0 : index
    %c0_2 = arith.constant 0 : index
    %3 = vector.load %arg2[%c0, %c0_1, %c0_2] : memref<1x16x256xf32, #tpu.memory_space<vmem>>, vector<1x16x256xf32>
    %4 = vector.shape_cast %3 : vector<1x16x256xf32> to vector<16x256xf32>
    %c0_3 = arith.constant 0 : index
    %c0_4 = arith.constant 0 : index
    %5 = vector.load %arg3[%c0_3, %c0_4] : memref<256x168xf32, #tpu.memory_space<vmem>>, vector<256x168xf32>
    %cst = arith.constant dense<0.000000e+00> : vector<16x168xf32>
    %6 = tpu.matmul %4, %5, %cst {dimension_numbers = #tpu.dot_dimension_numbers<[1], [0], [0], [1], [0, 0, 1, 1], [], []>} : vector<16x256xf32>, vector<256x168xf32>, vector<16x168xf32> -> vector<16x168xf32>
    %7 = tpu.iota {dimensions = array<i32: 0>} : vector<16x168xi32>
    %c16_i32 = arith.constant 16 : i32
    %8 = arith.muli %arg1, %c16_i32 : i32
    %9 = vector.broadcast %8 : i32 to vector<16x168xi32>
    %10 = arith.addi %7, %9 : vector<16x168xi32>
    %c16_i32_5 = arith.constant 16 : i32
    %11 = vector.broadcast %c16_i32_5 : i32 to vector<16x168xi32>
    %12 = arith.cmpi slt, %10, %11 : vector<16x168xi32>
    %cst_6 = arith.constant 0.000000e+00 : f32
    %13 = vector.broadcast %cst_6 : f32 to vector<16x168xf32>
    %14 = arith.select %12, %6, %13 : vector<16x168xi1>, vector<16x168xf32>
    %c0_7 = arith.constant 0 : index
    %c0_8 = arith.constant 0 : index
    %c0_9 = arith.constant 0 : index
    %15 = vector.load %arg5[%c0_7, %c0_8, %c0_9] : memref<1x1x168xf32, #tpu.memory_space<vmem>>, vector<1x1x168xf32>
    %cst_10 = arith.constant dense<0.000000e+00> : vector<168xf32>
    %16 = vector.multi_reduction <add>, %14, %cst_10 [0] : vector<16x168xf32> to vector<168xf32>
    %17 = vector.shape_cast %16 : vector<168xf32> to vector<1x168xf32>
    %18 = vector.shape_cast %17 : vector<1x168xf32> to vector<1x1x168xf32>
    %19 = arith.addf %15, %18 : vector<1x1x168xf32>
    %c0_11 = arith.constant 0 : index
    %c0_12 = arith.constant 0 : index
    %c0_13 = arith.constant 0 : index
    %20 = vector.load %arg5[%c0_11, %c0_12, %c0_13] : memref<1x1x168xf32, #tpu.memory_space<vmem>>, vector<1x1x168xf32>
    tpu.vector_store %arg5[%c0_11, %c0_12, %c0_13], %19 {strides = array<i32>} : memref<1x1x168xf32, #tpu.memory_space<vmem>>, vector<1x1x168xf32>,
    %c0_i32_14 = arith.constant 0 : i32
    %21 = arith.cmpi eq, %arg1, %c0_i32_14 : i32
    %22 = arith.extui %21 : i1 to i32
    %c0_i32_15 = arith.constant 0 : i32
    %23 = arith.cmpi ne, %22, %c0_i32_15 : i32
    scf.if %23 {
      %c0_16 = arith.constant 0 : index
      %c0_17 = arith.constant 0 : index
      %c0_18 = arith.constant 0 : index
      %24 = vector.load %arg5[%c0_16, %c0_17, %c0_18] : memref<1x1x168xf32, #tpu.memory_space<vmem>>, vector<1x1x168xf32>
      %cst_19 = arith.constant 6.250000e-02 : f32
      %25 = vector.broadcast %cst_19 : f32 to vector<1x1x168xf32>
      %26 = arith.mulf %24, %25 : vector<1x1x168xf32>
      %c0_20 = arith.constant 0 : index
      %c0_21 = arith.constant 0 : index
      %27 = vector.load %arg4[%c0_20, %c0_21] : memref<1x168xf32, #tpu.memory_space<vmem>>, vector<1x168xf32>
      %28 = vector.shape_cast %27 : vector<1x168xf32> to vector<1x1x168xf32>
      %29 = arith.addf %26, %28 : vector<1x1x168xf32>
      %c0_22 = arith.constant 0 : index
      %c0_23 = arith.constant 0 : index
      %c0_24 = arith.constant 0 : index
      %30 = vector.load %arg5[%c0_22, %c0_23, %c0_24] : memref<1x1x168xf32, #tpu.memory_space<vmem>>, vector<1x1x168xf32>
      tpu.vector_store %arg5[%c0_22, %c0_23, %c0_24], %29 {strides = array<i32>} : memref<1x1x168xf32, #tpu.memory_space<vmem>>, vector<1x1x168xf32>,
    } else {
    }
    return
  }
  func.func @transform_0(%arg0: i32, %arg1: i32) -> (i32, i32, i32) {
    %c0_i32 = arith.constant 0 : i32
    %c0_i32_0 = arith.constant 0 : i32
    return %arg0, %arg1, %c0_i32 : i32, i32, i32
  }
  func.func @transform_1(%arg0: i32, %arg1: i32) -> (i32, i32) {
    %c0_i32 = arith.constant 0 : i32
    %c0_i32_0 = arith.constant 0 : i32
    %c0_i32_1 = arith.constant 0 : i32
    return %c0_i32, %c0_i32_0 : i32, i32
  }
  func.func @transform_2(%arg0: i32, %arg1: i32) -> (i32, i32) {
    %c0_i32 = arith.constant 0 : i32
    %c0_i32_0 = arith.constant 0 : i32
    %c0_i32_1 = arith.constant 0 : i32
    return %c0_i32, %c0_i32_0 : i32, i32
  }
  func.func @transform_3(%arg0: i32, %arg1: i32) -> (i32, i32, i32) {
    %c0_i32 = arith.constant 0 : i32
    %c0_i32_0 = arith.constant 0 : i32
    %c0_i32_1 = arith.constant 0 : i32
    return %arg0, %c0_i32, %c0_i32_0 : i32, i32, i32
  }
}

module attributes {stable_mosaic.version = 11 : i64} {
  func.func @_head_kernel(%arg0: i32, %arg1: memref<2x168xf32, #tpu.memory_space<vmem>>, %arg2: memref<168x1024xf32, #tpu.memory_space<vmem>>, %arg3: memref<1x1024xf32, #tpu.memory_space<vmem>>, %arg4: memref<1024x1xf32, #tpu.memory_space<vmem>>, %arg5: memref<1x1xf32, #tpu.memory_space<vmem>>, %arg6: memref<2x1xf32, #tpu.memory_space<vmem>>) attributes {dimension_semantics = [#tpu.dimension_semantics<arbitrary>], iteration_bounds = array<i64: 1>, scalar_prefetch = 0 : i64, scratch_operands = 0 : i64, tpu.core_type = #tpu.core_type<tc>, window_params = [{pipeline_mode = #tpu.pipeline_mode<synchronous>, transform_indices = @transform_0, window_bounds = array<i64: 2, 168>}, {pipeline_mode = #tpu.pipeline_mode<synchronous>, transform_indices = @transform_1, window_bounds = array<i64: 168, 1024>}, {pipeline_mode = #tpu.pipeline_mode<synchronous>, transform_indices = @transform_2, window_bounds = array<i64: 1, 1024>}, {pipeline_mode = #tpu.pipeline_mode<synchronous>, transform_indices = @transform_3, window_bounds = array<i64: 1024, 1>}, {pipeline_mode = #tpu.pipeline_mode<synchronous>, transform_indices = @transform_4, window_bounds = array<i64: 1, 1>}, {pipeline_mode = #tpu.pipeline_mode<synchronous>, transform_indices = @transform_5, window_bounds = array<i64: 2, 1>}]} {
    %c0 = arith.constant 0 : index
    %c0_0 = arith.constant 0 : index
    %0 = vector.load %arg1[%c0, %c0_0] : memref<2x168xf32, #tpu.memory_space<vmem>>, vector<2x168xf32>
    %1 = arith.mulf %0, %0 : vector<2x168xf32>
    %cst = arith.constant dense<0.000000e+00> : vector<2xf32>
    %2 = vector.multi_reduction <add>, %1, %cst [1] : vector<2x168xf32> to vector<2xf32>
    %3 = vector.shape_cast %2 : vector<2xf32> to vector<2x1xf32>
    %cst_1 = arith.constant 1.000000e-24 : f32
    %4 = vector.broadcast %cst_1 : f32 to vector<2x1xf32>
    %5 = arith.maximumf %3, %4 : vector<2x1xf32>
    %6 = math.rsqrt %5 : vector<2x1xf32>
    %7 = vector.broadcast %6 : vector<2x1xf32> to vector<2x168xf32>
    %8 = arith.mulf %0, %7 : vector<2x168xf32>
    %c0_2 = arith.constant 0 : index
    %c0_3 = arith.constant 0 : index
    %9 = vector.load %arg2[%c0_2, %c0_3] : memref<168x1024xf32, #tpu.memory_space<vmem>>, vector<168x1024xf32>
    %cst_4 = arith.constant dense<0.000000e+00> : vector<2x1024xf32>
    %10 = tpu.matmul %8, %9, %cst_4 {dimension_numbers = #tpu.dot_dimension_numbers<[1], [0], [0], [1], [0, 0, 1, 1], [], []>} : vector<2x168xf32>, vector<168x1024xf32>, vector<2x1024xf32> -> vector<2x1024xf32>
    %c0_5 = arith.constant 0 : index
    %c0_6 = arith.constant 0 : index
    %11 = vector.load %arg3[%c0_5, %c0_6] : memref<1x1024xf32, #tpu.memory_space<vmem>>, vector<1x1024xf32>
    %12 = vector.broadcast %11 : vector<1x1024xf32> to vector<2x1024xf32>
    %13 = arith.addf %10, %12 : vector<2x1024xf32>
    %cst_7 = arith.constant 5.000000e-01 : f32
    %14 = vector.broadcast %cst_7 : f32 to vector<2x1024xf32>
    %15 = arith.mulf %14, %13 : vector<2x1024xf32>
    %cst_8 = arith.constant 0.707106769 : f32
    %16 = vector.broadcast %cst_8 : f32 to vector<2x1024xf32>
    %17 = arith.mulf %13, %16 : vector<2x1024xf32>
    %cst_9 = arith.constant 0.000000e+00 : f32
    %18 = vector.broadcast %cst_9 : f32 to vector<2x1024xf32>
    %19 = arith.cmpf oge, %17, %18 : vector<2x1024xf32>
    %cst_10 = arith.constant 1.000000e+00 : f32
    %cst_11 = arith.constant -1.000000e+00 : f32
    %20 = vector.broadcast %cst_10 : f32 to vector<2x1024xf32>
    %21 = vector.broadcast %cst_11 : f32 to vector<2x1024xf32>
    %22 = arith.select %19, %20, %21 : vector<2x1024xi1>, vector<2x1024xf32>
    %23 = math.absf %17 : vector<2x1024xf32>
    %cst_12 = arith.constant 0.327591091 : f32
    %24 = vector.broadcast %cst_12 : f32 to vector<2x1024xf32>
    %25 = arith.mulf %24, %23 : vector<2x1024xf32>
    %cst_13 = arith.constant 1.000000e+00 : f32
    %26 = vector.broadcast %cst_13 : f32 to vector<2x1024xf32>
    %27 = arith.addf %26, %25 : vector<2x1024xf32>
    %cst_14 = arith.constant 1.000000e+00 : f32
    %28 = vector.broadcast %cst_14 : f32 to vector<2x1024xf32>
    %29 = arith.divf %28, %27 : vector<2x1024xf32>
    %cst_15 = arith.constant 1.06140542 : f32
    %30 = vector.broadcast %cst_15 : f32 to vector<2x1024xf32>
    %31 = arith.mulf %30, %29 : vector<2x1024xf32>
    %cst_16 = arith.constant -1.45315206 : f32
    %32 = vector.broadcast %cst_16 : f32 to vector<2x1024xf32>
    %33 = arith.addf %31, %32 : vector<2x1024xf32>
    %34 = arith.mulf %33, %29 : vector<2x1024xf32>
    %cst_17 = arith.constant 1.42141378 : f32
    %35 = vector.broadcast %cst_17 : f32 to vector<2x1024xf32>
    %36 = arith.addf %34, %35 : vector<2x1024xf32>
    %37 = arith.mulf %36, %29 : vector<2x1024xf32>
    %cst_18 = arith.constant -0.284496725 : f32
    %38 = vector.broadcast %cst_18 : f32 to vector<2x1024xf32>
    %39 = arith.addf %37, %38 : vector<2x1024xf32>
    %40 = arith.mulf %39, %29 : vector<2x1024xf32>
    %cst_19 = arith.constant 0.254829586 : f32
    %41 = vector.broadcast %cst_19 : f32 to vector<2x1024xf32>
    %42 = arith.addf %40, %41 : vector<2x1024xf32>
    %43 = arith.mulf %42, %29 : vector<2x1024xf32>
    %cst_20 = arith.constant 0.000000e+00 : f32
    %44 = vector.broadcast %cst_20 : f32 to vector<2x1024xf32>
    %45 = arith.subf %44, %23 : vector<2x1024xf32>
    %46 = arith.mulf %45, %23 : vector<2x1024xf32>
    %47 = math.exp %46 : vector<2x1024xf32>
    %48 = arith.mulf %43, %47 : vector<2x1024xf32>
    %cst_21 = arith.constant 1.000000e+00 : f32
    %49 = vector.broadcast %cst_21 : f32 to vector<2x1024xf32>
    %50 = arith.subf %49, %48 : vector<2x1024xf32>
    %51 = arith.mulf %22, %50 : vector<2x1024xf32>
    %cst_22 = arith.constant 1.000000e+00 : f32
    %52 = vector.broadcast %cst_22 : f32 to vector<2x1024xf32>
    %53 = arith.addf %52, %51 : vector<2x1024xf32>
    %54 = arith.mulf %15, %53 : vector<2x1024xf32>
    %c0_23 = arith.constant 0 : index
    %c0_24 = arith.constant 0 : index
    %55 = vector.load %arg4[%c0_23, %c0_24] : memref<1024x1xf32, #tpu.memory_space<vmem>>, vector<1024x1xf32>
    %cst_25 = arith.constant dense<0.000000e+00> : vector<2x1xf32>
    %56 = tpu.matmul %54, %55, %cst_25 {dimension_numbers = #tpu.dot_dimension_numbers<[1], [0], [0], [1], [0, 0, 1, 1], [], []>} : vector<2x1024xf32>, vector<1024x1xf32>, vector<2x1xf32> -> vector<2x1xf32>
    %c0_26 = arith.constant 0 : index
    %c0_27 = arith.constant 0 : index
    %57 = vector.load %arg5[%c0_26, %c0_27] : memref<1x1xf32, #tpu.memory_space<vmem>>, vector<1x1xf32>
    %58 = vector.broadcast %57 : vector<1x1xf32> to vector<2x1xf32>
    %59 = arith.addf %56, %58 : vector<2x1xf32>
    %c0_28 = arith.constant 0 : index
    %c0_29 = arith.constant 0 : index
    %60 = vector.load %arg6[%c0_28, %c0_29] : memref<2x1xf32, #tpu.memory_space<vmem>>, vector<2x1xf32>
    tpu.vector_store %arg6[%c0_28, %c0_29], %59 {strides = array<i32>} : memref<2x1xf32, #tpu.memory_space<vmem>>, vector<2x1xf32>,
    return
  }
  func.func @transform_0(%arg0: i32) -> (i32, i32) {
    %c0_i32 = arith.constant 0 : i32
    %c0_i32_0 = arith.constant 0 : i32
    %c0_i32_1 = arith.constant 0 : i32
    return %c0_i32, %c0_i32_0 : i32, i32
  }
  func.func @transform_1(%arg0: i32) -> (i32, i32) {
    %c0_i32 = arith.constant 0 : i32
    %c0_i32_0 = arith.constant 0 : i32
    %c0_i32_1 = arith.constant 0 : i32
    return %c0_i32, %c0_i32_0 : i32, i32
  }
  func.func @transform_2(%arg0: i32) -> (i32, i32) {
    %c0_i32 = arith.constant 0 : i32
    %c0_i32_0 = arith.constant 0 : i32
    %c0_i32_1 = arith.constant 0 : i32
    return %c0_i32, %c0_i32_0 : i32, i32
  }
  func.func @transform_3(%arg0: i32) -> (i32, i32) {
    %c0_i32 = arith.constant 0 : i32
    %c0_i32_0 = arith.constant 0 : i32
    %c0_i32_1 = arith.constant 0 : i32
    return %c0_i32, %c0_i32_0 : i32, i32
  }
  func.func @transform_4(%arg0: i32) -> (i32, i32) {
    %c0_i32 = arith.constant 0 : i32
    %c0_i32_0 = arith.constant 0 : i32
    %c0_i32_1 = arith.constant 0 : i32
    return %c0_i32, %c0_i32_0 : i32, i32
  }
  func.func @transform_5(%arg0: i32) -> (i32, i32) {
    %c0_i32 = arith.constant 0 : i32
    %c0_i32_0 = arith.constant 0 : i32
    %c0_i32_1 = arith.constant 0 : i32
    return %c0_i32, %c0_i32_0 : i32, i32
  }
}

</mosaic_0001>

<llo_original>
// kernel: cqa_forward.2
$region0: #{cqa_forward.2}
  #allocation0 [shape = 'u32[]', space=smem, size = 0x4, offset = 0x4, fixed_abs, tag = 'smem constant byte address 0x4 - core index']
  #allocation1 [shape = 'u32[72,128]{1,0:T(1,128)}', space=vmem, size = 0x9000, scoped, tag = 'internal scratch']
  %s0 = inlined_call_operand.vmem [shape: f32[2,16,256], index: 0, kind: input, shape index: {}]
  %s1 = inlined_call_operand.vmem [shape: f32[256,168], index: 1, kind: input, shape index: {}]
  %s2 = inlined_call_operand.vmem [shape: f32[1,168], index: 2, kind: input, shape index: {}]
  %s3 = inlined_call_operand.vmem [shape: f32[2,1,168], index: 3, kind: output, shape index: {}]
  %s4 = sld [smem:[#allocation0]]
  $region53: #{cqa_forward.2} parent=0
    _
  %s6 = ssub.s32 1, %s4
  %s7 = scalar_select 0, %s6, %s4
  loop: start=0, step=1, limit=4
  $region2: #{cqa_forward.2} parent=0 // loop_pre_header
    _
  $region3: #{cqa_forward.2} parent=0 // loop_header
    %s9 = sphi 0, %s13
    %p10 = scmp.ge.s32.totalorder %s9, 4
    %s16 = sphi 0, %s28
    %s17 = sphi 0, %s24
    %s18 = sphi 0, %s16
    %s19 = sphi 0, %s17
    %s20 = sphi 0, %s18
    %s21 = sphi 0, %s19
    %s33 = sphi 0, %s35
    %s36 = sphi 0, %s33
    %s37 = sphi 0, %s36
    %s53 = sphi 0, %s37
    %s57 = sphi 0, %s57
    %s59 = sphi 0, %s57
    %s60 = sphi 0, %s59
    %s74 = sphi 0, %s60
    %s78 = sphi 0, %s78
    %s80 = sphi 0, %s78
    %s81 = sphi 0, %s80
    %s95 = sphi 0, %s81
    %s101 = sphi 0, %s103
    %s104 = sphi 0, %s101
    %s105 = sphi 0, %s104
    %s121 = sphi 0, %s105
  $region4: #{cqa_forward.2} parent=0 // loop_header_branch
    %12 = sbr.rel (%p10) target = $region8
  $region5: #{cqa_forward.2} parent=0 // loop_body
    %s14 = ssub.s32 %s9, 1
    %s15 = ssub.s32 %s9, 2
    %s22 = sadd.s32 1, %s17
    %p23 = scmp.ge.s32.totalorder %s22, 1
    %s24 = scalar_select %p23, 0, %s22
    %s25 = sadd.s32 1, %s16
    %s26 = scalar_select %p23, %s25, %s16
    %p27 = scmp.ge.s32.totalorder %s26, 2
    %s28 = scalar_select %p27, 0, %s26
    %s29 = ssub.s32 %s16, %s28
    %s30 = ssub.s32 %s17, %s24
    %s31 = sor.u32 %s29, %s30
    %p32 = scmp.eq.s32.totalorder %s31, 0
    %s34 = sadd.s32 %s33, 1
    %s35 = scalar_select %p32, %s33, %s34
    %p38 = pneg %p32
    %p39 = scmp.eq.s32.totalorder %s9, 1
    %p40 = por %p38, %p39
    %p41 = scmp.ne.s32.totalorder %s33, %s36
    %p42 = scmp.eq.s32.totalorder %s9, 0
    %p43 = por %p41, %p42
    %p44 = scmp.ne.s32.totalorder %s33, %s36
    %p45 = scmp.eq.s32.totalorder %s14, 1
    %p46 = por %p44, %p45
    %p47 = scmp.ne.s32.totalorder %s36, %s37
    %p48 = scmp.eq.s32.totalorder %s14, 0
    %p49 = por %p47, %p48
    %p50 = scmp.ne.s32.totalorder %s36, %s37
    %p51 = scmp.eq.s32.totalorder %s15, 1
    %p52 = por %p50, %p51
    %p54 = scmp.ne.s32.totalorder %s37, %s53
    %p55 = scmp.eq.s32.totalorder %s15, 0
    %p56 = por %p54, %p55
    %s58 = sadd.s32 %s57, 1
    %p61 = scmp.eq.s32.totalorder %s9, 1
    %p62 = scmp.ne.s32.totalorder %s57, %s59
    %p63 = scmp.eq.s32.totalorder %s9, 0
    %p64 = por %p62, %p63
    %p65 = scmp.ne.s32.totalorder %s57, %s59
    %p66 = scmp.eq.s32.totalorder %s14, 1
    %p67 = por %p65, %p66
    %p68 = scmp.ne.s32.totalorder %s59, %s60
    %p69 = scmp.eq.s32.totalorder %s14, 0
    %p70 = por %p68, %p69
    %p71 = scmp.ne.s32.totalorder %s59, %s60
    %p72 = scmp.eq.s32.totalorder %s15, 1
    %p73 = por %p71, %p72
    %p75 = scmp.ne.s32.totalorder %s60, %s74
    %p76 = scmp.eq.s32.totalorder %s15, 0
    %p77 = por %p75, %p76
    %s79 = sadd.s32 %s78, 1
    %p82 = scmp.eq.s32.totalorder %s9, 1
    %p83 = scmp.ne.s32.totalorder %s78, %s80
    %p84 = scmp.eq.s32.totalorder %s9, 0
    %p85 = por %p83, %p84
    %p86 = scmp.ne.s32.totalorder %s78, %s80
    %p87 = scmp.eq.s32.totalorder %s14, 1
    %p88 = por %p86, %p87
    %p89 = scmp.ne.s32.totalorder %s80, %s81
    %p90 = scmp.eq.s32.totalorder %s14, 0
    %p91 = por %p89, %p90
    %p92 = scmp.ne.s32.totalorder %s80, %s81
    %p93 = scmp.eq.s32.totalorder %s15, 1
    %p94 = por %p92, %p93
    %p96 = scmp.ne.s32.totalorder %s81, %s95
    %p97 = scmp.eq.s32.totalorder %s15, 0
    %p98 = por %p96, %p97
    %s99 = ssub.s32 %s16, %s28
    %p100 = scmp.eq.s32.totalorder %s99, 0
    %s102 = sadd.s32 %s101, 1
    %s103 = scalar_select %p100, %s101, %s102
    %p106 = pneg %p100
    %p107 = scmp.eq.s32.totalorder %s9, 1
    %p108 = por %p106, %p107
    %p109 = scmp.ne.s32.totalorder %s101, %s104
    %p110 = scmp.eq.s32.totalorder %s9, 0
    %p111 = por %p109, %p110
    %p112 = scmp.ne.s32.totalorder %s101, %s104
    %p113 = scmp.eq.s32.totalorder %s14, 1
    %p114 = por %p112, %p113
    %p115 = scmp.ne.s32.totalorder %s104, %s105
    %p116 = scmp.eq.s32.totalorder %s14, 0
    %p117 = por %p115, %p116
    %p118 = scmp.ne.s32.totalorder %s104, %s105
    %p119 = scmp.eq.s32.totalorder %s15, 1
    %p120 = por %p118, %p119
    %p122 = scmp.ne.s32.totalorder %s105, %s121
    %p123 = scmp.eq.s32.totalorder %s15, 0
    %p124 = por %p122, %p123
    %p125 = scmp.le.s32.totalorder 1, %s9
    %p126 = scmp.lt.s32.totalorder %s9, 3
    %p127 = pnand %p125, %p126
    %p128 = pneg %p127
    // Predicated region
    $region9: #{cqa_forward.2} parent=5 // pred_check
      _
    $region10: #{cqa_forward.2} parent=5 // pred_check_branch
      %130 = sbr.rel (%p127) target = $region12
    $region11: #{cqa_forward.2} parent=5 // pred_region
      %s131 = ssub.s32 %s9, 1
      // Predicated region
      $region13: #{cqa_forward.2} parent=11 // pred_check
        %p132 = pneg %p70
      $region14: #{cqa_forward.2} parent=11 // pred_check_branch
        %134 = sbr.rel (%p132) target = $region16
      $region15: #{cqa_forward.2} parent=11 // pred_region
        _
      $region16: #{cqa_forward.2} parent=11 // pred_fallthru
        _
      // Predicated region
      $region17: #{cqa_forward.2} parent=11 // pred_check
        %p135 = pneg %p91
      $region18: #{cqa_forward.2} parent=11 // pred_check_branch
        %137 = sbr.rel (%p135) target = $region20
      $region19: #{cqa_forward.2} parent=11 // pred_region
        _
      $region20: #{cqa_forward.2} parent=11 // pred_fallthru
        _
    $region12: #{cqa_forward.2} parent=5 // pred_fallthru
      _
    %p138 = scmp.lt.s32.totalorder %s9, 2
    // Predicated region
    $region21: #{cqa_forward.2} parent=5 // pred_check
      %p139 = pneg %p138
    $region22: #{cqa_forward.2} parent=5 // pred_check_branch
      %141 = sbr.rel (%p139) target = $region24
    $region23: #{cqa_forward.2} parent=5 // pred_region
      // Predicated region
      $region25: #{cqa_forward.2} parent=23 // pred_check
        %p142 = pneg %p43
      $region26: #{cqa_forward.2} parent=23 // pred_check_branch
        %144 = sbr.rel (%p142) target = $region28
      $region27: #{cqa_forward.2} parent=23 // pred_region
        %s145 = smul.u32 2, %s17
        %p146 = scmp.lt.s32.totalorder %s16, 1
        %s147 = scalar_select %p146, %s16, 1
        %p148 = scmp.lt.s32.totalorder %s145, 1
        %s149 = scalar_select %p148, %s145, 1
        %s150 = smul.addr %s149, 2
        %s151 = smul.addr %s147, 4
        %s152 = sadd.s32 %s150, %s151
        %s153 = smul.addr %s152, 8
        %s154 = scalar_lea.vmem %s0, %s153
        %s155 = smul.u32 2, %s17
      $region28: #{cqa_forward.2} parent=23 // pred_fallthru
        _
    $region24: #{cqa_forward.2} parent=5 // pred_fallthru
      _
    %p156 = scmp.le.s32.totalorder 1, %s9
    %p157 = scmp.lt.s32.totalorder %s9, 3
    %p158 = pnand %p156, %p157
    %p159 = pneg %p158
    // Predicated region
    $region29: #{cqa_forward.2} parent=5 // pred_check
      _
    $region30: #{cqa_forward.2} parent=5 // pred_check_branch
      %161 = sbr.rel (%p158) target = $region32
    $region31: #{cqa_forward.2} parent=5 // pred_region
      %s162 = ssub.s32 %s9, 1
      %s163 = smul.u32 2, %s19
      %p164 = scmp.lt.s32.totalorder %s18, 1
      %s165 = scalar_select %p164, %s18, 1
      %p166 = scmp.lt.s32.totalorder %s163, 1
      %s167 = scalar_select %p166, %s163, 1
      %s168 = smul.addr %s167, 2
      %s169 = smul.addr %s165, 4
      %s170 = sadd.s32 %s168, %s169
      %s171 = smul.addr %s170, 8
      %s172 = scalar_lea.vmem %s0, %s171
      %p173 = pneg %p49
      %p174 = pneg %p46
      %p175 = pneg %p70
      %p176 = pneg %p67
      %p177 = pneg %p91
      %p178 = pneg %p88
      %p179 = pneg %p117
      %p180 = pneg %p114
      %p181 = scmp.lt.s32.totalorder %s18, 1
      %s182 = scalar_select %p181, %s18, 1
      %s183 = smul.addr %s182, 2
      %s184 = scalar_lea.vmem %s3, %s183
      %s185 = smul.u32 2, %s19
      %p186 = scmp.lt.s32.totalorder %s18, 1
      %s187 = scalar_select %p186, %s18, 1
      %p188 = scmp.lt.s32.totalorder %s185, 1
      %s189 = scalar_select %p188, %s185, 1
      %s190 = smul.addr %s189, 2
      %s191 = smul.addr %s187, 4
      %s192 = sadd.s32 %s190, %s191
      %s193 = smul.addr %s192, 8
      %s194 = scalar_lea.vmem %s0, %s193
      %s195 = smul.u32 2, %s19
      %p196 = scmp.lt.s32.totalorder %s18, 1
      %s197 = scalar_select %p196, %s18, 1
      %s198 = smul.addr %s197, 2
      %s199 = scalar_lea.vmem %s3, %s198
      %p200 = scmp.eq.s32.totalorder %s19, 0
      // Predicated region
      $region33: #{cqa_forward.2} parent=31 // pred_check
        %p201 = pneg %p200
      $region34: #{cqa_forward.2} parent=31 // pred_check_branch
        %203 = sbr.rel (%p201) target = $region36
      $region35: #{cqa_forward.2} parent=31 // pred_region
        %v204 = vlaneseq
        %vm205 = vcmp.ge.s32.totalorder %v204, 0
        %vm206 = vcmp.lt.s32.totalorder %v204, 168
        %vm207 = vmand %vm205, %vm206
        %208 = vst.msk [vmem:[%s199] sm:$0x3] %vm207, 0.0
      $region36: #{cqa_forward.2} parent=31 // pred_fallthru
        _
      %v209 = vld [vmem:[%s194] sm:$0xff]
      %v210 = vld [vmem:[%s194 + $0x8] sm:$0xff]
      %v211 = vld [vmem:[%s194 + $0x10] sm:$0xff]
      %v212 = vld [vmem:[%s194 + $0x18] sm:$0xff]
      %v213 = vld [vmem:[%s1] sm:$0xff]
      %v214 = vld [vmem:[%s1 + $0x8] sm:$0xff]
      %v215 = vld [vmem:[%s1 + $0x10] sm:$0xff]
      %v216 = vld [vmem:[%s1 + $0x18] sm:$0xff]
      %v217 = vld [vmem:[%s1 + $0x20] sm:$0xff]
      %v218 = vld [vmem:[%s1 + $0x28] sm:$0xff]
      %v219 = vld [vmem:[%s1 + $0x30] sm:$0xff]
      %v220 = vld [vmem:[%s1 + $0x38] sm:$0xff]
      %v221 = vld [vmem:[%s1 + $0x40] sm:$0xff]
      %v222 = vld [vmem:[%s1 + $0x48] sm:$0xff]
      %v223 = vld [vmem:[%s1 + $0x50] sm:$0xff]
      %v224 = vld [vmem:[%s1 + $0x58] sm:$0xff]
      %v225 = vld [vmem:[%s1 + $0x60] sm:$0xff]
      %v226 = vld [vmem:[%s1 + $0x68] sm:$0xff]
      %v227 = vld [vmem:[%s1 + $0x70] sm:$0xff]
      %v228 = vld [vmem:[%s1 + $0x78] sm:$0xff]
      %v229 = vld [vmem:[%s1 + $0x80] sm:$0xff]
      %v230 = vld [vmem:[%s1 + $0x88] sm:$0xff]
      %v231 = vld [vmem:[%s1 + $0x90] sm:$0xff]
      %v232 = vld [vmem:[%s1 + $0x98] sm:$0xff]
      %v233 = vld [vmem:[%s1 + $0xa0] sm:$0xff]
      %v234 = vld [vmem:[%s1 + $0xa8] sm:$0xff]
      %v235 = vld [vmem:[%s1 + $0xb0] sm:$0xff]
      %v236 = vld [vmem:[%s1 + $0xb8] sm:$0xff]
      %v237 = vld [vmem:[%s1 + $0xc0] sm:$0xff]
      %v238 = vld [vmem:[%s1 + $0xc8] sm:$0xff]
      %v239 = vld [vmem:[%s1 + $0xd0] sm:$0xff]
      %v240 = vld [vmem:[%s1 + $0xd8] sm:$0xff]
      %v241 = vld [vmem:[%s1 + $0xe0] sm:$0xff]
      %v242 = vld [vmem:[%s1 + $0xe8] sm:$0xff]
      %v243 = vld [vmem:[%s1 + $0xf0] sm:$0xff]
      %v244 = vld [vmem:[%s1 + $0xf8] sm:$0xff]
      %v245 = vld [vmem:[%s1 + $0x100] sm:$0xff]
      %v246 = vld [vmem:[%s1 + $0x108] sm:$0xff]
      %v247 = vld [vmem:[%s1 + $0x110] sm:$0xff]
      %v248 = vld [vmem:[%s1 + $0x118] sm:$0xff]
      %v249 = vld [vmem:[%s1 + $0x120] sm:$0xff]
      %v250 = vld [vmem:[%s1 + $0x128] sm:$0xff]
      %v251 = vld [vmem:[%s1 + $0x130] sm:$0xff]
      %v252 = vld [vmem:[%s1 + $0x138] sm:$0xff]
      %v253 = vld [vmem:[%s1 + $0x140] sm:$0xff]
      %v254 = vld [vmem:[%s1 + $0x148] sm:$0xff]
      %v255 = vld [vmem:[%s1 + $0x150] sm:$0xff]
      %v256 = vld [vmem:[%s1 + $0x158] sm:$0xff]
      %v257 = vld [vmem:[%s1 + $0x160] sm:$0xff]
      %v258 = vld [vmem:[%s1 + $0x168] sm:$0xff]
      %v259 = vld [vmem:[%s1 + $0x170] sm:$0xff]
      %v260 = vld [vmem:[%s1 + $0x178] sm:$0xff]
      %v261 = vld [vmem:[%s1 + $0x180] sm:$0xff]
      %v262 = vld [vmem:[%s1 + $0x188] sm:$0xff]
      %v263 = vld [vmem:[%s1 + $0x190] sm:$0xff]
      %v264 = vld [vmem:[%s1 + $0x198] sm:$0xff]
      %v265 = vld [vmem:[%s1 + $0x1a0] sm:$0xff]
      %v266 = vld [vmem:[%s1 + $0x1a8] sm:$0xff]
      %v267 = vld [vmem:[%s1 + $0x1b0] sm:$0xff]
      %v268 = vld [vmem:[%s1 + $0x1b8] sm:$0xff]
      %v269 = vld [vmem:[%s1 + $0x1c0] sm:$0xff]
      %v270 = vld [vmem:[%s1 + $0x1c8] sm:$0xff]
      %v271 = vld [vmem:[%s1 + $0x1d0] sm:$0xff]
      %v272 = vld [vmem:[%s1 + $0x1d8] sm:$0xff]
      %v273 = vld [vmem:[%s1 + $0x1e0] sm:$0xff]
      %v274 = vld [vmem:[%s1 + $0x1e8] sm:$0xff]
      %v275 = vld [vmem:[%s1 + $0x1f0] sm:$0xff]
      %v276 = vld [vmem:[%s1 + $0x1f8] sm:$0xff]
      %277 = vmatpush.msra.mxu0 %v243
      %278 = vmatpush.msra.mxu0 %v241
      %279 = vmatpush.msra.mxu0 %v239
      %280 = vmatpush.msra.mxu0 %v237
      %281 = vmatpush.msra.mxu0 %v235
      %282 = vmatpush.msra.mxu0 %v233
      %283 = vmatpush.msra.mxu0 %v231
      %284 = vmatpush.msra.mxu0 %v229
      %285 = vmatpush.msra.mxu0 %v227
      %286 = vmatpush.msra.mxu0 %v225
      %287 = vmatpush.msra.mxu0 %v223
      %288 = vmatpush.msra.mxu0 %v221
      %289 = vmatpush.msra.mxu0 %v219
      %290 = vmatpush.msra.mxu0 %v217
      %291 = vmatpush.msra.mxu0 %v215
      %292 = vmatpush.msra.mxu0 %v213
      %293 = vmatmul.f32.gmra.mxu0 %v209
      %v294 = vpop.f32.mrf.mxu0
      %v295 = vadd.f32 0.0, %v294
      %296 = vmatmul.f32.gmra.mxu0 %v211
      %v297 = vpop.f32.mrf.mxu0
      %v298 = vadd.f32 0.0, %v297
      %299 = vdwg.mxu0
      %300 = vmatpush.msra.mxu0 %v275
      %301 = vmatpush.msra.mxu0 %v273
      %302 = vmatpush.msra.mxu0 %v271
      %303 = vmatpush.msra.mxu0 %v269
      %304 = vmatpush.msra.mxu0 %v267
      %305 = vmatpush.msra.mxu0 %v265
      %306 = vmatpush.msra.mxu0 %v263
      %307 = vmatpush.msra.mxu0 %v261
      %308 = vmatpush.msra.mxu0 %v259
      %309 = vmatpush.msra.mxu0 %v257
      %310 = vmatpush.msra.mxu0 %v255
      %311 = vmatpush.msra.mxu0 %v253
      %312 = vmatpush.msra.mxu0 %v251
      %313 = vmatpush.msra.mxu0 %v249
      %314 = vmatpush.msra.mxu0 %v247
      %315 = vmatpush.msra.mxu0 %v245
      %316 = vmatmul.f32.gmra.mxu0 %v210
      %v317 = vpop.f32.mrf.mxu0
      %v318 = vadd.f32 %v295, %v317
      %319 = vmatmul.f32.gmra.mxu0 %v212
      %v320 = vpop.f32.mrf.mxu0
      %v321 = vadd.f32 %v298, %v320
      %322 = vdwg.mxu0
      %323 = vmatpush.msra.mxu0 %v244
      %324 = vmatpush.msra.mxu0 %v242
      %325 = vmatpush.msra.mxu0 %v240
      %326 = vmatpush.msra.mxu0 %v238
      %327 = vmatpush.msra.mxu0 %v236
      %328 = vmatpush.msra.mxu0 %v234
      %329 = vmatpush.msra.mxu0 %v232
      %330 = vmatpush.msra.mxu0 %v230
      %331 = vmatpush.msra.mxu0 %v228
      %332 = vmatpush.msra.mxu0 %v226
      %333 = vmatpush.msra.mxu0 %v224
      %334 = vmatpush.msra.mxu0 %v222
      %335 = vmatpush.msra.mxu0 %v220
      %336 = vmatpush.msra.mxu0 %v218
      %337 = vmatpush.msra.mxu0 %v216
      %338 = vmatpush.msra.mxu0 %v214
      %339 = vmatmul.f32.gmra.mxu0 %v209
      %v340 = vpop.f32.mrf.mxu0
      %v341 = vadd.f32 0.0, %v340
      %342 = vmatmul.f32.gmra.mxu0 %v211
      %v343 = vpop.f32.mrf.mxu0
      %v344 = vadd.f32 0.0, %v343
      %345 = vdwg.mxu0
      %346 = vmatpush.msra.mxu0 %v276
      %347 = vmatpush.msra.mxu0 %v274
      %348 = vmatpush.msra.mxu0 %v272
      %349 = vmatpush.msra.mxu0 %v270
      %350 = vmatpush.msra.mxu0 %v268
      %351 = vmatpush.msra.mxu0 %v266
      %352 = vmatpush.msra.mxu0 %v264
      %353 = vmatpush.msra.mxu0 %v262
      %354 = vmatpush.msra.mxu0 %v260
      %355 = vmatpush.msra.mxu0 %v258
      %356 = vmatpush.msra.mxu0 %v256
      %357 = vmatpush.msra.mxu0 %v254
      %358 = vmatpush.msra.mxu0 %v252
      %359 = vmatpush.msra.mxu0 %v250
      %360 = vmatpush.msra.mxu0 %v248
      %361 = vmatpush.msra.mxu0 %v246
      %362 = vmatmul.f32.gmra.mxu0 %v210
      %v363 = vpop.f32.mrf.mxu0
      %v364 = vadd.f32 %v341, %v363
      %365 = vmatmul.f32.gmra.mxu0 %v212
      %v366 = vpop.f32.mrf.mxu0
      %v367 = vadd.f32 %v344, %v366
      %368 = vdwg.mxu0
      %v369 = vlaneseq
      %v370 = vshrl.u32 %v369, 7
      %v371 = vadd.s32 %v370, 8
      %s372 = smul.u32 %s19, 16
      %v373 = vstv %s372
      %v374 = vadd.s32 %v370, %v373
      %v375 = vadd.s32 %v371, %v373
      %vm376 = vcmp.lt.s32.totalorder %v374, 16
      %vm377 = vcmp.lt.s32.totalorder %v375, 16
      %v378 = vsel %vm376, %v318, 0.0
      %v379 = vsel %vm376, %v364, 0.0
      %v380 = vsel %vm377, %v321, 0.0
      %v381 = vsel %vm377, %v367, 0.0
      %v382 = vld [vmem:[%s199] sm:$0x3]
      %v383 = vadd.f32 %v378, %v380
      %v384 = vrot.slane %v383, 4
      %v385 = vadd.f32 %v383, %v384
      %v386 = vrot.slane %v385, 2
      %v387 = vadd.f32 %v385, %v386
      %v388 = vrot.slane %v387, 1
      %v389 = vadd.f32 %v387, %v388
      %vm390 = vcmask 326656
      %v391 = vsel %vm390, %v379, 0.0
      %v392 = vsel %vm390, %v381, 0.0
      %v393 = vadd.f32 %v391, %v392
      %v394 = vrot.slane %v393, 4
      %v395 = vadd.f32 %v393, %v394
      %v396 = vrot.slane %v395, 2
      %v397 = vadd.f32 %v395, %v396
      %v398 = vrot.slane %v397, 1
      %v399 = vadd.f32 %v397, %v398
      %v402 = vrot.slane %v399, 7
      %vm403 = vcmask 1040384
      %v404 = vsel %vm403, %v389, %v402
      %v406 = vadd.f32 %v382, %v404
      %v407 = vlaneseq
      %vm408 = vcmp.ge.s32.totalorder %v407, 0
      %vm409 = vcmp.lt.s32.totalorder %v407, 168
      %vm410 = vmand %vm408, %vm409
      %411 = vst.msk [vmem:[%s199] sm:$0x3] %vm410, %v406
      // Predicated region
      $region37: #{cqa_forward.2} parent=31 // pred_check
        %p412 = pneg %p200
      $region38: #{cqa_forward.2} parent=31 // pred_check_branch
        %414 = sbr.rel (%p412) target = $region40
      $region39: #{cqa_forward.2} parent=31 // pred_region
        %v415 = vld [vmem:[%s199] sm:$0x3]
        %v416 = vmul.f32 %v415, 0.0625
        %v417 = vld [vmem:[%s2] sm:$0x3]
        %v418 = vadd.f32 %v416, %v417
        %419 = vst.msk [vmem:[%s199] sm:$0x3] %vm410, %v418
      $region40: #{cqa_forward.2} parent=31 // pred_fallthru
        _
      %p420 = scmp.lt.s32.totalorder %s18, 1
      %s421 = scalar_select %p420, %s18, 1
      %s422 = smul.addr %s421, 2
      %s423 = scalar_lea.vmem %s3, %s422
      // Predicated region
      $region41: #{cqa_forward.2} parent=31 // pred_check
        %p424 = pneg %p114
      $region42: #{cqa_forward.2} parent=31 // pred_check_branch
        %426 = sbr.rel (%p424) target = $region44
      $region43: #{cqa_forward.2} parent=31 // pred_region
        _
      $region44: #{cqa_forward.2} parent=31 // pred_fallthru
        _
    $region32: #{cqa_forward.2} parent=5 // pred_fallthru
      _
    %p427 = scmp.le.s32.totalorder 2, %s9
    // Predicated region
    $region45: #{cqa_forward.2} parent=5 // pred_check
      %p428 = pneg %p427
    $region46: #{cqa_forward.2} parent=5 // pred_check_branch
      %430 = sbr.rel (%p428) target = $region48
    $region47: #{cqa_forward.2} parent=5 // pred_region
      %s431 = ssub.s32 %s9, 2
      // Predicated region
      $region49: #{cqa_forward.2} parent=47 // pred_check
        %p432 = pneg %p120
      $region50: #{cqa_forward.2} parent=47 // pred_check_branch
        %434 = sbr.rel (%p432) target = $region52
      $region51: #{cqa_forward.2} parent=47 // pred_region
        %p435 = scmp.lt.s32.totalorder %s20, 1
        %s436 = scalar_select %p435, %s20, 1
        %s437 = smul.addr %s436, 2
        %s438 = scalar_lea.vmem %s3, %s437
      $region52: #{cqa_forward.2} parent=47 // pred_fallthru
        _
    $region48: #{cqa_forward.2} parent=5 // pred_fallthru
      _
  $region6: #{cqa_forward.2} parent=0 // loop_footer
    %s13 = sadd.s32 1, %s9
  $region7: #{cqa_forward.2} parent=0 // loop_footer_branch
    %8 = sbr.rel target = $region3
  $region8: #{cqa_forward.2} parent=0 // loop_exit
    _

// kernel: cqa_forward.3
$region0: #{cqa_forward.3}
  #allocation0 [shape = 'u32[]', space=smem, size = 0x4, offset = 0x4, fixed_abs, tag = 'smem constant byte address 0x4 - core index']
  #allocation1 [shape = 'u32[72,128]{1,0:T(1,128)}', space=vmem, size = 0x9000, scoped, tag = 'internal scratch']
  #allocation2 [shape = 'f32[1,1]{1,0:T(1,128)S(1)}', space=vmem, size = 0x200, scoped, tag = 'scoped memory for cqa_forward.3']
  %s0 = inlined_call_operand.vmem [shape: f32[2,168], index: 0, kind: input, shape index: {}]
  %s1 = inlined_call_operand.vmem [shape: f32[168,1024], index: 1, kind: input, shape index: {}]
  %s2 = inlined_call_operand.vmem [shape: f32[1,1024], index: 2, kind: input, shape index: {}]
  %s3 = inlined_call_operand.vmem [shape: f32[1024,1], index: 3, kind: input, shape index: {}]
  %s4 = inlined_call_operand.<no memory space> [shape: f32[1,1], index: 4, kind: input, shape index: {}]
  %s5 = inlined_call_operand.vmem [shape: f32[2,1], index: 5, kind: output, shape index: {}]
  %s6 = sld [smem:[#allocation0]]
  $region30: #{cqa_forward.3} parent=0
    _
  %s8 = ssub.s32 1, %s6
  %s9 = scalar_select 0, %s8, %s6
  %v10 = vstv %s4
  %11 = vst [vmem:[#allocation2] sm:$0x1] %v10
  // Predicated region
  $region2: #{cqa_forward.3} parent=0 // pred_check
    _
  $region3: #{cqa_forward.3} parent=0 // pred_check_branch
    %13 = sbr.rel (0) target = $region5
  $region4: #{cqa_forward.3} parent=0 // pred_region
    _
  $region5: #{cqa_forward.3} parent=0 // pred_fallthru
    _
  // Predicated region
  $region6: #{cqa_forward.3} parent=0 // pred_check
    _
  $region7: #{cqa_forward.3} parent=0 // pred_check_branch
    %15 = sbr.rel (0) target = $region9
  $region8: #{cqa_forward.3} parent=0 // pred_region
    _
  $region9: #{cqa_forward.3} parent=0 // pred_fallthru
    _
  // Predicated region
  $region10: #{cqa_forward.3} parent=0 // pred_check
    _
  $region11: #{cqa_forward.3} parent=0 // pred_check_branch
    %17 = sbr.rel (0) target = $region13
  $region12: #{cqa_forward.3} parent=0 // pred_region
    _
  $region13: #{cqa_forward.3} parent=0 // pred_fallthru
    _
  // Predicated region
  $region14: #{cqa_forward.3} parent=0 // pred_check
    _
  $region15: #{cqa_forward.3} parent=0 // pred_check_branch
    %19 = sbr.rel (0) target = $region17
  $region16: #{cqa_forward.3} parent=0 // pred_region
    _
  $region17: #{cqa_forward.3} parent=0 // pred_fallthru
    _
  // Predicated region
  $region18: #{cqa_forward.3} parent=0 // pred_check
    _
  $region19: #{cqa_forward.3} parent=0 // pred_check_branch
    %21 = sbr.rel (0) target = $region21
  $region20: #{cqa_forward.3} parent=0 // pred_region
    _
  $region21: #{cqa_forward.3} parent=0 // pred_fallthru
    _
  %v22 = vld [vmem:[%s0] sm:$0xf]
  %v23 = vmul.f32 %v22, %v22
  %25 = vst [vmem:[#allocation1] ss:$4 sm:$0xff] %v23
  %v26 = vld.sshfl [vmem:[#allocation1] sm:$0xff pattern:$0x73625140]
  %v27 = vld.sshfl [vmem:[#allocation1 + $0x8] sm:$0xff pattern:$0x73625140]
  %vm30 = vcmask 1041408
  %v31 = vsel %vm30, %v26, 0.0
  %vm32 = vcmask 320512
  %v33 = vsel %vm32, %v27, 0.0
  %v34 = vadd.f32 %v31, %v33
  %35 = vadd.xlane.f32.xlu0 %v34
  %v36 = vpop.xlane.xlu0 %35
  %v37 = vmax.f32 %v36, 1e-24
  %v38 = vrsqrt.pop %v37
  %v39 = vmul.f32 %v38, %v37
  %v40 = vmul.f32 %v39, %v38
  %v41 = vmul.f32 0.5, %v40
  %v42 = vsub.f32 1.5, %v41
  %v43 = vmul.f32 %v38, %v42
  %vm44 = vweird.f32 %v37
  %vm45 = vweird.f32 %v38
  %vm46 = vmor %vm44, %vm45
  %v47 = vsel %vm46, %v38, %v43
  %v50 = vunpack.c.l.s4 269488144
  %v51 = vunpack.c.0.s8 %v50
  %v52 = vperm.slane %v47, %v51
  %v54 = vmul.f32 %v22, %v52
  %v55 = vld [vmem:[%s1] sm:$0xff]
  %v56 = vld [vmem:[%s1 + $0x8] sm:$0xff]
  %v57 = vld [vmem:[%s1 + $0x10] sm:$0xff]
  %v58 = vld [vmem:[%s1 + $0x18] sm:$0xff]
  %v59 = vld [vmem:[%s1 + $0x20] sm:$0xff]
  %v60 = vld [vmem:[%s1 + $0x28] sm:$0xff]
  %v61 = vld [vmem:[%s1 + $0x30] sm:$0xff]
  %v62 = vld [vmem:[%s1 + $0x38] sm:$0xff]
  %v63 = vld [vmem:[%s1 + $0x40] sm:$0xff]
  %v64 = vld [vmem:[%s1 + $0x48] sm:$0xff]
  %v65 = vld [vmem:[%s1 + $0x50] sm:$0xff]
  %v66 = vld [vmem:[%s1 + $0x58] sm:$0xff]
  %v67 = vld [vmem:[%s1 + $0x60] sm:$0xff]
  %v68 = vld [vmem:[%s1 + $0x68] sm:$0xff]
  %v69 = vld [vmem:[%s1 + $0x70] sm:$0xff]
  %v70 = vld [vmem:[%s1 + $0x78] sm:$0xff]
  %v71 = vld [vmem:[%s1 + $0x80] sm:$0xff]
  %v72 = vld [vmem:[%s1 + $0x88] sm:$0xff]
  %v73 = vld [vmem:[%s1 + $0x90] sm:$0xff]
  %v74 = vld [vmem:[%s1 + $0x98] sm:$0xff]
  %v75 = vld [vmem:[%s1 + $0xa0] sm:$0xff]
  %v76 = vld [vmem:[%s1 + $0xa8] sm:$0xff]
  %v77 = vld [vmem:[%s1 + $0xb0] sm:$0xff]
  %v78 = vld [vmem:[%s1 + $0xb8] sm:$0xff]
  %v79 = vld [vmem:[%s1 + $0xc0] sm:$0xff]
  %v80 = vld [vmem:[%s1 + $0xc8] sm:$0xff]
  %v81 = vld [vmem:[%s1 + $0xd0] sm:$0xff]
  %v82 = vld [vmem:[%s1 + $0xd8] sm:$0xff]
  %v83 = vld [vmem:[%s1 + $0xe0] sm:$0xff]
  %v84 = vld [vmem:[%s1 + $0xe8] sm:$0xff]
  %v85 = vld [vmem:[%s1 + $0xf0] sm:$0xff]
  %v86 = vld [vmem:[%s1 + $0xf8] sm:$0xff]
  %v87 = vld [vmem:[%s1 + $0x100] sm:$0xff]
  %v88 = vld [vmem:[%s1 + $0x108] sm:$0xff]
  %v89 = vld [vmem:[%s1 + $0x110] sm:$0xff]
  %v90 = vld [vmem:[%s1 + $0x118] sm:$0xff]
  %v91 = vld [vmem:[%s1 + $0x120] sm:$0xff]
  %v92 = vld [vmem:[%s1 + $0x128] sm:$0xff]
  %v93 = vld [vmem:[%s1 + $0x130] sm:$0xff]
  %v94 = vld [vmem:[%s1 + $0x138] sm:$0xff]
  %v95 = vld [vmem:[%s1 + $0x140] sm:$0xff]
  %v96 = vld [vmem:[%s1 + $0x148] sm:$0xff]
  %v97 = vld [vmem:[%s1 + $0x150] sm:$0xff]
  %v98 = vld [vmem:[%s1 + $0x158] sm:$0xff]
  %v99 = vld [vmem:[%s1 + $0x160] sm:$0xff]
  %v100 = vld [vmem:[%s1 + $0x168] sm:$0xff]
  %v101 = vld [vmem:[%s1 + $0x170] sm:$0xff]
  %v102 = vld [vmem:[%s1 + $0x178] sm:$0xff]
  %v103 = vld [vmem:[%s1 + $0x180] sm:$0xff]
  %v104 = vld [vmem:[%s1 + $0x188] sm:$0xff]
  %v105 = vld [vmem:[%s1 + $0x190] sm:$0xff]
  %v106 = vld [vmem:[%s1 + $0x198] sm:$0xff]
  %v107 = vld [vmem:[%s1 + $0x1a0] sm:$0xff]
  %v108 = vld [vmem:[%s1 + $0x1a8] sm:$0xff]
  %v109 = vld [vmem:[%s1 + $0x1b0] sm:$0xff]
  %v110 = vld [vmem:[%s1 + $0x1b8] sm:$0xff]
  %v111 = vld [vmem:[%s1 + $0x1c0] sm:$0xff]
  %v112 = vld [vmem:[%s1 + $0x1c8] sm:$0xff]
  %v113 = vld [vmem:[%s1 + $0x1d0] sm:$0xff]
  %v114 = vld [vmem:[%s1 + $0x1d8] sm:$0xff]
  %v115 = vld [vmem:[%s1 + $0x1e0] sm:$0xff]
  %v116 = vld [vmem:[%s1 + $0x1e8] sm:$0xff]
  %v117 = vld [vmem:[%s1 + $0x1f0] sm:$0xff]
  %v118 = vld [vmem:[%s1 + $0x1f8] sm:$0xff]
  %v119 = vld [vmem:[%s1 + $0x200] sm:$0xff]
  %v120 = vld [vmem:[%s1 + $0x208] sm:$0xff]
  %v121 = vld [vmem:[%s1 + $0x210] sm:$0xff]
  %v122 = vld [vmem:[%s1 + $0x218] sm:$0xff]
  %v123 = vld [vmem:[%s1 + $0x220] sm:$0xff]
  %v124 = vld [vmem:[%s1 + $0x228] sm:$0xff]
  %v125 = vld [vmem:[%s1 + $0x230] sm:$0xff]
  %v126 = vld [vmem:[%s1 + $0x238] sm:$0xff]
  %v127 = vld [vmem:[%s1 + $0x240] sm:$0xff]
  %v128 = vld [vmem:[%s1 + $0x248] sm:$0xff]
  %v129 = vld [vmem:[%s1 + $0x250] sm:$0xff]
  %v130 = vld [vmem:[%s1 + $0x258] sm:$0xff]
  %v131 = vld [vmem:[%s1 + $0x260] sm:$0xff]
  %v132 = vld [vmem:[%s1 + $0x268] sm:$0xff]
  %v133 = vld [vmem:[%s1 + $0x270] sm:$0xff]
  %v134 = vld [vmem:[%s1 + $0x278] sm:$0xff]
  %v135 = vld [vmem:[%s1 + $0x280] sm:$0xff]
  %v136 = vld [vmem:[%s1 + $0x288] sm:$0xff]
  %v137 = vld [vmem:[%s1 + $0x290] sm:$0xff]
  %v138 = vld [vmem:[%s1 + $0x298] sm:$0xff]
  %v139 = vld [vmem:[%s1 + $0x2a0] sm:$0xff]
  %v140 = vld [vmem:[%s1 + $0x2a8] sm:$0xff]
  %v141 = vld [vmem:[%s1 + $0x2b0] sm:$0xff]
  %v142 = vld [vmem:[%s1 + $0x2b8] sm:$0xff]
  %v143 = vld [vmem:[%s1 + $0x2c0] sm:$0xff]
  %v144 = vld [vmem:[%s1 + $0x2c8] sm:$0xff]
  %v145 = vld [vmem:[%s1 + $0x2d0] sm:$0xff]
  %v146 = vld [vmem:[%s1 + $0x2d8] sm:$0xff]
  %v147 = vld [vmem:[%s1 + $0x2e0] sm:$0xff]
  %v148 = vld [vmem:[%s1 + $0x2e8] sm:$0xff]
  %v149 = vld [vmem:[%s1 + $0x2f0] sm:$0xff]
  %v150 = vld [vmem:[%s1 + $0x2f8] sm:$0xff]
  %v151 = vld [vmem:[%s1 + $0x300] sm:$0xff]
  %v152 = vld [vmem:[%s1 + $0x308] sm:$0xff]
  %v153 = vld [vmem:[%s1 + $0x310] sm:$0xff]
  %v154 = vld [vmem:[%s1 + $0x318] sm:$0xff]
  %v155 = vld [vmem:[%s1 + $0x320] sm:$0xff]
  %v156 = vld [vmem:[%s1 + $0x328] sm:$0xff]
  %v157 = vld [vmem:[%s1 + $0x330] sm:$0xff]
  %v158 = vld [vmem:[%s1 + $0x338] sm:$0xff]
  %v159 = vld [vmem:[%s1 + $0x340] sm:$0xff]
  %v160 = vld [vmem:[%s1 + $0x348] sm:$0xff]
  %v161 = vld [vmem:[%s1 + $0x350] sm:$0xff]
  %v162 = vld [vmem:[%s1 + $0x358] sm:$0xff]
  %v163 = vld [vmem:[%s1 + $0x360] sm:$0xff]
  %v164 = vld [vmem:[%s1 + $0x368] sm:$0xff]
  %v165 = vld [vmem:[%s1 + $0x370] sm:$0xff]
  %v166 = vld [vmem:[%s1 + $0x378] sm:$0xff]
  %v167 = vld [vmem:[%s1 + $0x380] sm:$0xff]
  %v168 = vld [vmem:[%s1 + $0x388] sm:$0xff]
  %v169 = vld [vmem:[%s1 + $0x390] sm:$0xff]
  %v170 = vld [vmem:[%s1 + $0x398] sm:$0xff]
  %v171 = vld [vmem:[%s1 + $0x3a0] sm:$0xff]
  %v172 = vld [vmem:[%s1 + $0x3a8] sm:$0xff]
  %v173 = vld [vmem:[%s1 + $0x3b0] sm:$0xff]
  %v174 = vld [vmem:[%s1 + $0x3b8] sm:$0xff]
  %v175 = vld [vmem:[%s1 + $0x3c0] sm:$0xff]
  %v176 = vld [vmem:[%s1 + $0x3c8] sm:$0xff]
  %v177 = vld [vmem:[%s1 + $0x3d0] sm:$0xff]
  %v178 = vld [vmem:[%s1 + $0x3d8] sm:$0xff]
  %v179 = vld [vmem:[%s1 + $0x3e0] sm:$0xff]
  %v180 = vld [vmem:[%s1 + $0x3e8] sm:$0xff]
  %v181 = vld [vmem:[%s1 + $0x3f0] sm:$0xff]
  %v182 = vld [vmem:[%s1 + $0x3f8] sm:$0xff]
  %v183 = vld [vmem:[%s1 + $0x400] sm:$0xff]
  %v184 = vld [vmem:[%s1 + $0x408] sm:$0xff]
  %v185 = vld [vmem:[%s1 + $0x410] sm:$0xff]
  %v186 = vld [vmem:[%s1 + $0x418] sm:$0xff]
  %v187 = vld [vmem:[%s1 + $0x420] sm:$0xff]
  %v188 = vld [vmem:[%s1 + $0x428] sm:$0xff]
  %v189 = vld [vmem:[%s1 + $0x430] sm:$0xff]
  %v190 = vld [vmem:[%s1 + $0x438] sm:$0xff]
  %v191 = vld [vmem:[%s1 + $0x440] sm:$0xff]
  %v192 = vld [vmem:[%s1 + $0x448] sm:$0xff]
  %v193 = vld [vmem:[%s1 + $0x450] sm:$0xff]
  %v194 = vld [vmem:[%s1 + $0x458] sm:$0xff]
  %v195 = vld [vmem:[%s1 + $0x460] sm:$0xff]
  %v196 = vld [vmem:[%s1 + $0x468] sm:$0xff]
  %v197 = vld [vmem:[%s1 + $0x470] sm:$0xff]
  %v198 = vld [vmem:[%s1 + $0x478] sm:$0xff]
  %v199 = vld [vmem:[%s1 + $0x480] sm:$0xff]
  %v200 = vld [vmem:[%s1 + $0x488] sm:$0xff]
  %v201 = vld [vmem:[%s1 + $0x490] sm:$0xff]
  %v202 = vld [vmem:[%s1 + $0x498] sm:$0xff]
  %v203 = vld [vmem:[%s1 + $0x4a0] sm:$0xff]
  %v204 = vld [vmem:[%s1 + $0x4a8] sm:$0xff]
  %v205 = vld [vmem:[%s1 + $0x4b0] sm:$0xff]
  %v206 = vld [vmem:[%s1 + $0x4b8] sm:$0xff]
  %v207 = vld [vmem:[%s1 + $0x4c0] sm:$0xff]
  %v208 = vld [vmem:[%s1 + $0x4c8] sm:$0xff]
  %v209 = vld [vmem:[%s1 + $0x4d0] sm:$0xff]
  %v210 = vld [vmem:[%s1 + $0x4d8] sm:$0xff]
  %v211 = vld [vmem:[%s1 + $0x4e0] sm:$0xff]
  %v212 = vld [vmem:[%s1 + $0x4e8] sm:$0xff]
  %v213 = vld [vmem:[%s1 + $0x4f0] sm:$0xff]
  %v214 = vld [vmem:[%s1 + $0x4f8] sm:$0xff]
  %v215 = vld [vmem:[%s1 + $0x500] sm:$0xff]
  %v216 = vld [vmem:[%s1 + $0x508] sm:$0xff]
  %v217 = vld [vmem:[%s1 + $0x510] sm:$0xff]
  %v218 = vld [vmem:[%s1 + $0x518] sm:$0xff]
  %v219 = vld [vmem:[%s1 + $0x520] sm:$0xff]
  %v220 = vld [vmem:[%s1 + $0x528] sm:$0xff]
  %v221 = vld [vmem:[%s1 + $0x530] sm:$0xff]
  %v222 = vld [vmem:[%s1 + $0x538] sm:$0xff]
  %v223 = vld [vmem:[%s2] sm:$0xff]
  %v225 = vperm.slane %v223, 0
  %v226 = vperm.slane %v223, 1
  %v227 = vperm.slane %v223, 2
  %v228 = vperm.slane %v223, 3
  %v229 = vperm.slane %v223, 4
  %v230 = vperm.slane %v223, 5
  %v231 = vperm.slane %v223, 6
  %v232 = vperm.slane %v223, 7
  %242 = vst [vmem:[#allocation1] ss:$4 sm:$0xff] %v54
  %v243 = vld.sshfl [vmem:[#allocation1] sm:$0xff pattern:$0x73625140]
  %v244 = vld.sshfl [vmem:[#allocation1 + $0x8] sm:$0xff pattern:$0x73625140]
  %vm246 = vcmask 326656
  %v247 = vsel %vm246, %v244, 0
  %249 = vmatpush.msra.mxu0 %v175
  %250 = vmatpush.msra.mxu0 %v167
  %251 = vmatpush.msra.mxu0 %v159
  %252 = vmatpush.msra.mxu0 %v151
  %253 = vmatpush.msra.mxu0 %v143
  %254 = vmatpush.msra.mxu0 %v135
  %255 = vmatpush.msra.mxu0 %v127
  %256 = vmatpush.msra.mxu0 %v119
  %257 = vmatpush.msra.mxu0 %v111
  %258 = vmatpush.msra.mxu0 %v103
  %259 = vmatpush.msra.mxu0 %v95
  %260 = vmatpush.msra.mxu0 %v87
  %261 = vmatpush.msra.mxu0 %v79
  %262 = vmatpush.msra.mxu0 %v71
  %263 = vmatpush.msra.mxu0 %v63
  %264 = vmatpush.msra.mxu0 %v55
  %265 = vmatmul.f32.gmra.mxu0 %v243
  %v266 = vpop.f32.mrf.mxu0
  %v267 = vadd.f32 %v225, %v266
  %268 = vdwg.mxu0
  %269 = vmatpush.msra.mxu0 0.0
  %270 = vmatpush.msra.mxu0 0.0
  %271 = vmatpush.msra.mxu0 0.0
  %272 = vmatpush.msra.mxu0 0.0
  %273 = vmatpush.msra.mxu0 0.0
  %274 = vmatpush.msra.mxu0 0.0
  %275 = vmatpush.msra.mxu0 0.0
  %276 = vmatpush.msra.mxu0 0.0
  %277 = vmatpush.msra.mxu0 0.0
  %278 = vmatpush.msra.mxu0 0.0
  %279 = vmatpush.msra.mxu0 0.0
  %280 = vmatpush.msra.mxu0 %v215
  %281 = vmatpush.msra.mxu0 %v207
  %282 = vmatpush.msra.mxu0 %v199
  %283 = vmatpush.msra.mxu0 %v191
  %284 = vmatpush.msra.mxu0 %v183
  %285 = vmatmul.f32.gmra.mxu0 %v247
  %v286 = vpop.f32.mrf.mxu0
  %v287 = vadd.f32 %v267, %v286
  %288 = vdwg.mxu0
  %289 = vmatpush.msra.mxu0 %v176
  %290 = vmatpush.msra.mxu0 %v168
  %291 = vmatpush.msra.mxu0 %v160
  %292 = vmatpush.msra.mxu0 %v152
  %293 = vmatpush.msra.mxu0 %v144
  %294 = vmatpush.msra.mxu0 %v136
  %295 = vmatpush.msra.mxu0 %v128
  %296 = vmatpush.msra.mxu0 %v120
  %297 = vmatpush.msra.mxu0 %v112
  %298 = vmatpush.msra.mxu0 %v104
  %299 = vmatpush.msra.mxu0 %v96
  %300 = vmatpush.msra.mxu0 %v88
  %301 = vmatpush.msra.mxu0 %v80
  %302 = vmatpush.msra.mxu0 %v72
  %303 = vmatpush.msra.mxu0 %v64
  %304 = vmatpush.msra.mxu0 %v56
  %305 = vmatmul.f32.gmra.mxu0 %v243
  %v306 = vpop.f32.mrf.mxu0
  %v307 = vadd.f32 %v226, %v306
  %308 = vdwg.mxu0
  %309 = vmatpush.msra.mxu0 0.0
  %310 = vmatpush.msra.mxu0 0.0
  %311 = vmatpush.msra.mxu0 0.0
  %312 = vmatpush.msra.mxu0 0.0
  %313 = vmatpush.msra.mxu0 0.0
  %314 = vmatpush.msra.mxu0 0.0
  %315 = vmatpush.msra.mxu0 0.0
  %316 = vmatpush.msra.mxu0 0.0
  %317 = vmatpush.msra.mxu0 0.0
  %318 = vmatpush.msra.mxu0 0.0
  %319 = vmatpush.msra.mxu0 0.0
  %320 = vmatpush.msra.mxu0 %v216
  %321 = vmatpush.msra.mxu0 %v208
  %322 = vmatpush.msra.mxu0 %v200
  %323 = vmatpush.msra.mxu0 %v192
  %324 = vmatpush.msra.mxu0 %v184
  %325 = vmatmul.f32.gmra.mxu0 %v247
  %v326 = vpop.f32.mrf.mxu0
  %v327 = vadd.f32 %v307, %v326
  %328 = vdwg.mxu0
  %329 = vmatpush.msra.mxu0 %v177
  %330 = vmatpush.msra.mxu0 %v169
  %331 = vmatpush.msra.mxu0 %v161
  %332 = vmatpush.msra.mxu0 %v153
  %333 = vmatpush.msra.mxu0 %v145
  %334 = vmatpush.msra.mxu0 %v137
  %335 = vmatpush.msra.mxu0 %v129
  %336 = vmatpush.msra.mxu0 %v121
  %337 = vmatpush.msra.mxu0 %v113
  %338 = vmatpush.msra.mxu0 %v105
  %339 = vmatpush.msra.mxu0 %v97
  %340 = vmatpush.msra.mxu0 %v89
  %341 = vmatpush.msra.mxu0 %v81
  %342 = vmatpush.msra.mxu0 %v73
  %343 = vmatpush.msra.mxu0 %v65
  %344 = vmatpush.msra.mxu0 %v57
  %345 = vmatmul.f32.gmra.mxu0 %v243
  %v346 = vpop.f32.mrf.mxu0
  %v347 = vadd.f32 %v227, %v346
  %348 = vdwg.mxu0
  %349 = vmatpush.msra.mxu0 0.0
  %350 = vmatpush.msra.mxu0 0.0
  %351 = vmatpush.msra.mxu0 0.0
  %352 = vmatpush.msra.mxu0 0.0
  %353 = vmatpush.msra.mxu0 0.0
  %354 = vmatpush.msra.mxu0 0.0
  %355 = vmatpush.msra.mxu0 0.0
  %356 = vmatpush.msra.mxu0 0.0
  %357 = vmatpush.msra.mxu0 0.0
  %358 = vmatpush.msra.mxu0 0.0
  %359 = vmatpush.msra.mxu0 0.0
  %360 = vmatpush.msra.mxu0 %v217
  %361 = vmatpush.msra.mxu0 %v209
  %362 = vmatpush.msra.mxu0 %v201
  %363 = vmatpush.msra.mxu0 %v193
  %364 = vmatpush.msra.mxu0 %v185
  %365 = vmatmul.f32.gmra.mxu0 %v247
  %v366 = vpop.f32.mrf.mxu0
  %v367 = vadd.f32 %v347, %v366
  %368 = vdwg.mxu0
  %369 = vmatpush.msra.mxu0 %v178
  %370 = vmatpush.msra.mxu0 %v170
  %371 = vmatpush.msra.mxu0 %v162
  %372 = vmatpush.msra.mxu0 %v154
  %373 = vmatpush.msra.mxu0 %v146
  %374 = vmatpush.msra.mxu0 %v138
  %375 = vmatpush.msra.mxu0 %v130
  %376 = vmatpush.msra.mxu0 %v122
  %377 = vmatpush.msra.mxu0 %v114
  %378 = vmatpush.msra.mxu0 %v106
  %379 = vmatpush.msra.mxu0 %v98
  %380 = vmatpush.msra.mxu0 %v90
  %381 = vmatpush.msra.mxu0 %v82
  %382 = vmatpush.msra.mxu0 %v74
  %383 = vmatpush.msra.mxu0 %v66
  %384 = vmatpush.msra.mxu0 %v58
  %385 = vmatmul.f32.gmra.mxu0 %v243
  %v386 = vpop.f32.mrf.mxu0
  %v387 = vadd.f32 %v228, %v386
  %388 = vdwg.mxu0
  %389 = vmatpush.msra.mxu0 0.0
  %390 = vmatpush.msra.mxu0 0.0
  %391 = vmatpush.msra.mxu0 0.0
  %392 = vmatpush.msra.mxu0 0.0
  %393 = vmatpush.msra.mxu0 0.0
  %394 = vmatpush.msra.mxu0 0.0
  %395 = vmatpush.msra.mxu0 0.0
  %396 = vmatpush.msra.mxu0 0.0
  %397 = vmatpush.msra.mxu0 0.0
  %398 = vmatpush.msra.mxu0 0.0
  %399 = vmatpush.msra.mxu0 0.0
  %400 = vmatpush.msra.mxu0 %v218
  %401 = vmatpush.msra.mxu0 %v210
  %402 = vmatpush.msra.mxu0 %v202
  %403 = vmatpush.msra.mxu0 %v194
  %404 = vmatpush.msra.mxu0 %v186
  %405 = vmatmul.f32.gmra.mxu0 %v247
  %v406 = vpop.f32.mrf.mxu0
  %v407 = vadd.f32 %v387, %v406
  %408 = vdwg.mxu0
  %409 = vmatpush.msra.mxu0 %v179
  %410 = vmatpush.msra.mxu0 %v171
  %411 = vmatpush.msra.mxu0 %v163
  %412 = vmatpush.msra.mxu0 %v155
  %413 = vmatpush.msra.mxu0 %v147
  %414 = vmatpush.msra.mxu0 %v139
  %415 = vmatpush.msra.mxu0 %v131
  %416 = vmatpush.msra.mxu0 %v123
  %417 = vmatpush.msra.mxu0 %v115
  %418 = vmatpush.msra.mxu0 %v107
  %419 = vmatpush.msra.mxu0 %v99
  %420 = vmatpush.msra.mxu0 %v91
  %421 = vmatpush.msra.mxu0 %v83
  %422 = vmatpush.msra.mxu0 %v75
  %423 = vmatpush.msra.mxu0 %v67
  %424 = vmatpush.msra.mxu0 %v59
  %425 = vmatmul.f32.gmra.mxu0 %v243
  %v426 = vpop.f32.mrf.mxu0
  %v427 = vadd.f32 %v229, %v426
  %428 = vdwg.mxu0
  %429 = vmatpush.msra.mxu0 0.0
  %430 = vmatpush.msra.mxu0 0.0
  %431 = vmatpush.msra.mxu0 0.0
  %432 = vmatpush.msra.mxu0 0.0
  %433 = vmatpush.msra.mxu0 0.0
  %434 = vmatpush.msra.mxu0 0.0
  %435 = vmatpush.msra.mxu0 0.0
  %436 = vmatpush.msra.mxu0 0.0
  %437 = vmatpush.msra.mxu0 0.0
  %438 = vmatpush.msra.mxu0 0.0
  %439 = vmatpush.msra.mxu0 0.0
  %440 = vmatpush.msra.mxu0 %v219
  %441 = vmatpush.msra.mxu0 %v211
  %442 = vmatpush.msra.mxu0 %v203
  %443 = vmatpush.msra.mxu0 %v195
  %444 = vmatpush.msra.mxu0 %v187
  %445 = vmatmul.f32.gmra.mxu0 %v247
  %v446 = vpop.f32.mrf.mxu0
  %v447 = vadd.f32 %v427, %v446
  %448 = vdwg.mxu0
  %449 = vmatpush.msra.mxu0 %v180
  %450 = vmatpush.msra.mxu0 %v172
  %451 = vmatpush.msra.mxu0 %v164
  %452 = vmatpush.msra.mxu0 %v156
  %453 = vmatpush.msra.mxu0 %v148
  %454 = vmatpush.msra.mxu0 %v140
  %455 = vmatpush.msra.mxu0 %v132
  %456 = vmatpush.msra.mxu0 %v124
  %457 = vmatpush.msra.mxu0 %v116
  %458 = vmatpush.msra.mxu0 %v108
  %459 = vmatpush.msra.mxu0 %v100
  %460 = vmatpush.msra.mxu0 %v92
  %461 = vmatpush.msra.mxu0 %v84
  %462 = vmatpush.msra.mxu0 %v76
  %463 = vmatpush.msra.mxu0 %v68
  %464 = vmatpush.msra.mxu0 %v60
  %465 = vmatmul.f32.gmra.mxu0 %v243
  %v466 = vpop.f32.mrf.mxu0
  %v467 = vadd.f32 %v230, %v466
  %468 = vdwg.mxu0
  %469 = vmatpush.msra.mxu0 0.0
  %470 = vmatpush.msra.mxu0 0.0
  %471 = vmatpush.msra.mxu0 0.0
  %472 = vmatpush.msra.mxu0 0.0
  %473 = vmatpush.msra.mxu0 0.0
  %474 = vmatpush.msra.mxu0 0.0
  %475 = vmatpush.msra.mxu0 0.0
  %476 = vmatpush.msra.mxu0 0.0
  %477 = vmatpush.msra.mxu0 0.0
  %478 = vmatpush.msra.mxu0 0.0
  %479 = vmatpush.msra.mxu0 0.0
  %480 = vmatpush.msra.mxu0 %v220
  %481 = vmatpush.msra.mxu0 %v212
  %482 = vmatpush.msra.mxu0 %v204
  %483 = vmatpush.msra.mxu0 %v196
  %484 = vmatpush.msra.mxu0 %v188
  %485 = vmatmul.f32.gmra.mxu0 %v247
  %v486 = vpop.f32.mrf.mxu0
  %v487 = vadd.f32 %v467, %v486
  %488 = vdwg.mxu0
  %489 = vmatpush.msra.mxu0 %v181
  %490 = vmatpush.msra.mxu0 %v173
  %491 = vmatpush.msra.mxu0 %v165
  %492 = vmatpush.msra.mxu0 %v157
  %493 = vmatpush.msra.mxu0 %v149
  %494 = vmatpush.msra.mxu0 %v141
  %495 = vmatpush.msra.mxu0 %v133
  %496 = vmatpush.msra.mxu0 %v125
  %497 = vmatpush.msra.mxu0 %v117
  %498 = vmatpush.msra.mxu0 %v109
  %499 = vmatpush.msra.mxu0 %v101
  %500 = vmatpush.msra.mxu0 %v93
  %501 = vmatpush.msra.mxu0 %v85
  %502 = vmatpush.msra.mxu0 %v77
  %503 = vmatpush.msra.mxu0 %v69
  %504 = vmatpush.msra.mxu0 %v61
  %505 = vmatmul.f32.gmra.mxu0 %v243
  %v506 = vpop.f32.mrf.mxu0
  %v507 = vadd.f32 %v231, %v506
  %508 = vdwg.mxu0
  %509 = vmatpush.msra.mxu0 0.0
  %510 = vmatpush.msra.mxu0 0.0
  %511 = vmatpush.msra.mxu0 0.0
  %512 = vmatpush.msra.mxu0 0.0
  %513 = vmatpush.msra.mxu0 0.0
  %514 = vmatpush.msra.mxu0 0.0
  %515 = vmatpush.msra.mxu0 0.0
  %516 = vmatpush.msra.mxu0 0.0
  %517 = vmatpush.msra.mxu0 0.0
  %518 = vmatpush.msra.mxu0 0.0
  %519 = vmatpush.msra.mxu0 0.0
  %520 = vmatpush.msra.mxu0 %v221
  %521 = vmatpush.msra.mxu0 %v213
  %522 = vmatpush.msra.mxu0 %v205
  %523 = vmatpush.msra.mxu0 %v197
  %524 = vmatpush.msra.mxu0 %v189
  %525 = vmatmul.f32.gmra.mxu0 %v247
  %v526 = vpop.f32.mrf.mxu0
  %v527 = vadd.f32 %v507, %v526
  %528 = vdwg.mxu0
  %529 = vmatpush.msra.mxu0 %v182
  %530 = vmatpush.msra.mxu0 %v174
  %531 = vmatpush.msra.mxu0 %v166
  %532 = vmatpush.msra.mxu0 %v158
  %533 = vmatpush.msra.mxu0 %v150
  %534 = vmatpush.msra.mxu0 %v142
  %535 = vmatpush.msra.mxu0 %v134
  %536 = vmatpush.msra.mxu0 %v126
  %537 = vmatpush.msra.mxu0 %v118
  %538 = vmatpush.msra.mxu0 %v110
  %539 = vmatpush.msra.mxu0 %v102
  %540 = vmatpush.msra.mxu0 %v94
  %541 = vmatpush.msra.mxu0 %v86
  %542 = vmatpush.msra.mxu0 %v78
  %543 = vmatpush.msra.mxu0 %v70
  %544 = vmatpush.msra.mxu0 %v62
  %545 = vmatmul.f32.gmra.mxu0 %v243
  %v546 = vpop.f32.mrf.mxu0
  %v547 = vadd.f32 %v232, %v546
  %548 = vdwg.mxu0
  %549 = vmatpush.msra.mxu0 0.0
  %550 = vmatpush.msra.mxu0 0.0
  %551 = vmatpush.msra.mxu0 0.0
  %552 = vmatpush.msra.mxu0 0.0
  %553 = vmatpush.msra.mxu0 0.0
  %554 = vmatpush.msra.mxu0 0.0
  %555 = vmatpush.msra.mxu0 0.0
  %556 = vmatpush.msra.mxu0 0.0
  %557 = vmatpush.msra.mxu0 0.0
  %558 = vmatpush.msra.mxu0 0.0
  %559 = vmatpush.msra.mxu0 0.0
  %560 = vmatpush.msra.mxu0 %v222
  %561 = vmatpush.msra.mxu0 %v214
  %562 = vmatpush.msra.mxu0 %v206
  %563 = vmatpush.msra.mxu0 %v198
  %564 = vmatpush.msra.mxu0 %v190
  %565 = vmatmul.f32.gmra.mxu0 %v247
  %v566 = vpop.f32.mrf.mxu0
  %v567 = vadd.f32 %v547, %v566
  %568 = vdwg.mxu0
  %v569 = vmul.f32 %v287, 0.5
  %v570 = vmul.f32 %v327, 0.5
  %v571 = vmul.f32 %v367, 0.5
  %v572 = vmul.f32 %v407, 0.5
  %v573 = vmul.f32 %v447, 0.5
  %v574 = vmul.f32 %v487, 0.5
  %v575 = vmul.f32 %v527, 0.5
  %v576 = vmul.f32 %v567, 0.5
  %v577 = vmul.f32 %v287, 0.70710677
  %v578 = vmul.f32 %v327, 0.70710677
  %v579 = vmul.f32 %v367, 0.70710677
  %v580 = vmul.f32 %v407, 0.70710677
  %v581 = vmul.f32 %v447, 0.70710677
  %v582 = vmul.f32 %v487, 0.70710677
  %v583 = vmul.f32 %v527, 0.70710677
  %v584 = vmul.f32 %v567, 0.70710677
  %vm585 = vcmp.ge.f32.partialorder %v577, 0.0
  %vm586 = vcmp.ge.f32.partialorder %v578, 0.0
  %vm587 = vcmp.ge.f32.partialorder %v579, 0.0
  %vm588 = vcmp.ge.f32.partialorder %v580, 0.0
  %vm589 = vcmp.ge.f32.partialorder %v581, 0.0
  %vm590 = vcmp.ge.f32.partialorder %v582, 0.0
  %vm591 = vcmp.ge.f32.partialorder %v583, 0.0
  %vm592 = vcmp.ge.f32.partialorder %v584, 0.0
  %v593 = vsel %vm585, 1.0, -1.0
  %v594 = vsel %vm586, 1.0, -1.0
  %v595 = vsel %vm587, 1.0, -1.0
  %v596 = vsel %vm588, 1.0, -1.0
  %v597 = vsel %vm589, 1.0, -1.0
  %v598 = vsel %vm590, 1.0, -1.0
  %v599 = vsel %vm591, 1.0, -1.0
  %v600 = vsel %vm592, 1.0, -1.0
  %v601 = vand.u32 2147483647, %v577
  %v602 = vand.u32 2147483647, %v578
  %v603 = vand.u32 2147483647, %v579
  %v604 = vand.u32 2147483647, %v580
  %v605 = vand.u32 2147483647, %v581
  %v606 = vand.u32 2147483647, %v582
  %v607 = vand.u32 2147483647, %v583
  %v608 = vand.u32 2147483647, %v584
  %v609 = vmul.f32 %v601, 0.3275911
  %v610 = vmul.f32 %v602, 0.3275911
  %v611 = vmul.f32 %v603, 0.3275911
  %v612 = vmul.f32 %v604, 0.3275911
  %v613 = vmul.f32 %v605, 0.3275911
  %v614 = vmul.f32 %v606, 0.3275911
  %v615 = vmul.f32 %v607, 0.3275911
  %v616 = vmul.f32 %v608, 0.3275911
  %v617 = vadd.f32 %v609, 1.0
  %v618 = vadd.f32 %v610, 1.0
  %v619 = vadd.f32 %v611, 1.0
  %v620 = vadd.f32 %v612, 1.0
  %v621 = vadd.f32 %v613, 1.0
  %v622 = vadd.f32 %v614, 1.0
  %v623 = vadd.f32 %v615, 1.0
  %v624 = vadd.f32 %v616, 1.0
  %v625 = vrcp.pop %v617
  %v626 = vmul.f32 %v617, %v625
  %v627 = vsub.f32 1.0, %v626
  %v628 = vmul.f32 %v625, %v627
  %v629 = vadd.f32 %v625, %v628
  %vm630 = vweird.f32 %v617
  %vm631 = vweird.f32 %v625
  %vm632 = vmor %vm630, %vm631
  %v633 = vsel %vm632, %v625, %v629
  %v634 = vand.u32 2147483647, %v617
  %vm635 = vcmp.eq.f32.partialorder %v634, 8.507059e+37
  %v636 = vand.u32 %v617, 2147483648
  %v637 = vor.u32 1.1754944e-38, %v636
  %v638 = vsel %vm635, %v637, %v633
  %v639 = vmul.f32 1.0, %v638
  %v640 = vrcp.pop %v618
  %v641 = vmul.f32 %v618, %v640
  %v642 = vsub.f32 1.0, %v641
  %v643 = vmul.f32 %v640, %v642
  %v644 = vadd.f32 %v640, %v643
  %vm645 = vweird.f32 %v618
  %vm646 = vweird.f32 %v640
  %vm647 = vmor %vm645, %vm646
  %v648 = vsel %vm647, %v640, %v644
  %v649 = vand.u32 2147483647, %v618
  %vm650 = vcmp.eq.f32.partialorder %v649, 8.507059e+37
  %v651 = vand.u32 %v618, 2147483648
  %v652 = vor.u32 1.1754944e-38, %v651
  %v653 = vsel %vm650, %v652, %v648
  %v654 = vmul.f32 1.0, %v653
  %v655 = vrcp.pop %v619
  %v656 = vmul.f32 %v619, %v655
  %v657 = vsub.f32 1.0, %v656
  %v658 = vmul.f32 %v655, %v657
  %v659 = vadd.f32 %v655, %v658
  %vm660 = vweird.f32 %v619
  %vm661 = vweird.f32 %v655
  %vm662 = vmor %vm660, %vm661
  %v663 = vsel %vm662, %v655, %v659
  %v664 = vand.u32 2147483647, %v619
  %vm665 = vcmp.eq.f32.partialorder %v664, 8.507059e+37
  %v666 = vand.u32 %v619, 2147483648
  %v667 = vor.u32 1.1754944e-38, %v666
  %v668 = vsel %vm665, %v667, %v663
  %v669 = vmul.f32 1.0, %v668
  %v670 = vrcp.pop %v620
  %v671 = vmul.f32 %v620, %v670
  %v672 = vsub.f32 1.0, %v671
  %v673 = vmul.f32 %v670, %v672
  %v674 = vadd.f32 %v670, %v673
  %vm675 = vweird.f32 %v620
  %vm676 = vweird.f32 %v670
  %vm677 = vmor %vm675, %vm676
  %v678 = vsel %vm677, %v670, %v674
  %v679 = vand.u32 2147483647, %v620
  %vm680 = vcmp.eq.f32.partialorder %v679, 8.507059e+37
  %v681 = vand.u32 %v620, 2147483648
  %v682 = vor.u32 1.1754944e-38, %v681
  %v683 = vsel %vm680, %v682, %v678
  %v684 = vmul.f32 1.0, %v683
  %v685 = vrcp.pop %v621
  %v686 = vmul.f32 %v621, %v685
  %v687 = vsub.f32 1.0, %v686
  %v688 = vmul.f32 %v685, %v687
  %v689 = vadd.f32 %v685, %v688
  %vm690 = vweird.f32 %v621
  %vm691 = vweird.f32 %v685
  %vm692 = vmor %vm690, %vm691
  %v693 = vsel %vm692, %v685, %v689
  %v694 = vand.u32 2147483647, %v621
  %vm695 = vcmp.eq.f32.partialorder %v694, 8.507059e+37
  %v696 = vand.u32 %v621, 2147483648
  %v697 = vor.u32 1.1754944e-38, %v696
  %v698 = vsel %vm695, %v697, %v693
  %v699 = vmul.f32 1.0, %v698
  %v700 = vrcp.pop %v622
  %v701 = vmul.f32 %v622, %v700
  %v702 = vsub.f32 1.0, %v701
  %v703 = vmul.f32 %v700, %v702
  %v704 = vadd.f32 %v700, %v703
  %vm705 = vweird.f32 %v622
  %vm706 = vweird.f32 %v700
  %vm707 = vmor %vm705, %vm706
  %v708 = vsel %vm707, %v700, %v704
  %v709 = vand.u32 2147483647, %v622
  %vm710 = vcmp.eq.f32.partialorder %v709, 8.507059e+37
  %v711 = vand.u32 %v622, 2147483648
  %v712 = vor.u32 1.1754944e-38, %v711
  %v713 = vsel %vm710, %v712, %v708
  %v714 = vmul.f32 1.0, %v713
  %v715 = vrcp.pop %v623
  %v716 = vmul.f32 %v623, %v715
  %v717 = vsub.f32 1.0, %v716
  %v718 = vmul.f32 %v715, %v717
  %v719 = vadd.f32 %v715, %v718
  %vm720 = vweird.f32 %v623
  %vm721 = vweird.f32 %v715
  %vm722 = vmor %vm720, %vm721
  %v723 = vsel %vm722, %v715, %v719
  %v724 = vand.u32 2147483647, %v623
  %vm725 = vcmp.eq.f32.partialorder %v724, 8.507059e+37
  %v726 = vand.u32 %v623, 2147483648
  %v727 = vor.u32 1.1754944e-38, %v726
  %v728 = vsel %vm725, %v727, %v723
  %v729 = vmul.f32 1.0, %v728
  %v730 = vrcp.pop %v624
  %v731 = vmul.f32 %v624, %v730
  %v732 = vsub.f32 1.0, %v731
  %v733 = vmul.f32 %v730, %v732
  %v734 = vadd.f32 %v730, %v733
  %vm735 = vweird.f32 %v624
  %vm736 = vweird.f32 %v730
  %vm737 = vmor %vm735, %vm736
  %v738 = vsel %vm737, %v730, %v734
  %v739 = vand.u32 2147483647, %v624
  %vm740 = vcmp.eq.f32.partialorder %v739, 8.507059e+37
  %v741 = vand.u32 %v624, 2147483648
  %v742 = vor.u32 1.1754944e-38, %v741
  %v743 = vsel %vm740, %v742, %v738
  %v744 = vmul.f32 1.0, %v743
  %v745 = vmul.f32 %v639, 1.0614054
  %v746 = vmul.f32 %v654, 1.0614054
  %v747 = vmul.f32 %v669, 1.0614054
  %v748 = vmul.f32 %v684, 1.0614054
  %v749 = vmul.f32 %v699, 1.0614054
  %v750 = vmul.f32 %v714, 1.0614054
  %v751 = vmul.f32 %v729, 1.0614054
  %v752 = vmul.f32 %v744, 1.0614054
  %v753 = vadd.f32 %v745, -1.4531521
  %v754 = vadd.f32 %v746, -1.4531521
  %v755 = vadd.f32 %v747, -1.4531521
  %v756 = vadd.f32 %v748, -1.4531521
  %v757 = vadd.f32 %v749, -1.4531521
  %v758 = vadd.f32 %v750, -1.4531521
  %v759 = vadd.f32 %v751, -1.4531521
  %v760 = vadd.f32 %v752, -1.4531521
  %v761 = vmul.f32 %v753, %v639
  %v762 = vmul.f32 %v754, %v654
  %v763 = vmul.f32 %v755, %v669
  %v764 = vmul.f32 %v756, %v684
  %v765 = vmul.f32 %v757, %v699
  %v766 = vmul.f32 %v758, %v714
  %v767 = vmul.f32 %v759, %v729
  %v768 = vmul.f32 %v760, %v744
  %v769 = vadd.f32 %v761, 1.4214138
  %v770 = vadd.f32 %v762, 1.4214138
  %v771 = vadd.f32 %v763, 1.4214138
  %v772 = vadd.f32 %v764, 1.4214138
  %v773 = vadd.f32 %v765, 1.4214138
  %v774 = vadd.f32 %v766, 1.4214138
  %v775 = vadd.f32 %v767, 1.4214138
  %v776 = vadd.f32 %v768, 1.4214138
  %v777 = vmul.f32 %v769, %v639
  %v778 = vmul.f32 %v770, %v654
  %v779 = vmul.f32 %v771, %v669
  %v780 = vmul.f32 %v772, %v684
  %v781 = vmul.f32 %v773, %v699
  %v782 = vmul.f32 %v774, %v714
  %v783 = vmul.f32 %v775, %v729
  %v784 = vmul.f32 %v776, %v744
  %v785 = vadd.f32 %v777, -0.28449672
  %v786 = vadd.f32 %v778, -0.28449672
  %v787 = vadd.f32 %v779, -0.28449672
  %v788 = vadd.f32 %v780, -0.28449672
  %v789 = vadd.f32 %v781, -0.28449672
  %v790 = vadd.f32 %v782, -0.28449672
  %v791 = vadd.f32 %v783, -0.28449672
  %v792 = vadd.f32 %v784, -0.28449672
  %v793 = vmul.f32 %v785, %v639
  %v794 = vmul.f32 %v786, %v654
  %v795 = vmul.f32 %v787, %v669
  %v796 = vmul.f32 %v788, %v684
  %v797 = vmul.f32 %v789, %v699
  %v798 = vmul.f32 %v790, %v714
  %v799 = vmul.f32 %v791, %v729
  %v800 = vmul.f32 %v792, %v744
  %v801 = vadd.f32 %v793, 0.2548296
  %v802 = vadd.f32 %v794, 0.2548296
  %v803 = vadd.f32 %v795, 0.2548296
  %v804 = vadd.f32 %v796, 0.2548296
  %v805 = vadd.f32 %v797, 0.2548296
  %v806 = vadd.f32 %v798, 0.2548296
  %v807 = vadd.f32 %v799, 0.2548296
  %v808 = vadd.f32 %v800, 0.2548296
  %v809 = vmul.f32 %v801, %v639
  %v810 = vmul.f32 %v802, %v654
  %v811 = vmul.f32 %v803, %v669
  %v812 = vmul.f32 %v804, %v684
  %v813 = vmul.f32 %v805, %v699
  %v814 = vmul.f32 %v806, %v714
  %v815 = vmul.f32 %v807, %v729
  %v816 = vmul.f32 %v808, %v744
  %v817 = vsub.f32 0.0, %v601
  %v818 = vsub.f32 0.0, %v602
  %v819 = vsub.f32 0.0, %v603
  %v820 = vsub.f32 0.0, %v604
  %v821 = vsub.f32 0.0, %v605
  %v822 = vsub.f32 0.0, %v606
  %v823 = vsub.f32 0.0, %v607
  %v824 = vsub.f32 0.0, %v608
  %v825 = vmul.f32 %v817, %v601
  %v826 = vmul.f32 %v818, %v602
  %v827 = vmul.f32 %v819, %v603
  %v828 = vmul.f32 %v820, %v604
  %v829 = vmul.f32 %v821, %v605
  %v830 = vmul.f32 %v822, %v606
  %v831 = vmul.f32 %v823, %v607
  %v832 = vmul.f32 %v824, %v608
  %v833 = vmul.f32 %v825, 1.442695
  %v834 = vpow.pop %v833
  %v835 = vmul.f32 %v826, 1.442695
  %v836 = vpow.pop %v835
  %v837 = vmul.f32 %v827, 1.442695
  %v838 = vpow.pop %v837
  %v839 = vmul.f32 %v828, 1.442695
  %v840 = vpow.pop %v839
  %v841 = vmul.f32 %v829, 1.442695
  %v842 = vpow.pop %v841
  %v843 = vmul.f32 %v830, 1.442695
  %v844 = vpow.pop %v843
  %v845 = vmul.f32 %v831, 1.442695
  %v846 = vpow.pop %v845
  %v847 = vmul.f32 %v832, 1.442695
  %v848 = vpow.pop %v847
  %v849 = vmul.f32 %v809, %v834
  %v850 = vmul.f32 %v810, %v836
  %v851 = vmul.f32 %v811, %v838
  %v852 = vmul.f32 %v812, %v840
  %v853 = vmul.f32 %v813, %v842
  %v854 = vmul.f32 %v814, %v844
  %v855 = vmul.f32 %v815, %v846
  %v856 = vmul.f32 %v816, %v848
  %v857 = vsub.f32 1.0, %v849
  %v858 = vsub.f32 1.0, %v850
  %v859 = vsub.f32 1.0, %v851
  %v860 = vsub.f32 1.0, %v852
  %v861 = vsub.f32 1.0, %v853
  %v862 = vsub.f32 1.0, %v854
  %v863 = vsub.f32 1.0, %v855
  %v864 = vsub.f32 1.0, %v856
  %v865 = vmul.f32 %v593, %v857
  %v866 = vmul.f32 %v594, %v858
  %v867 = vmul.f32 %v595, %v859
  %v868 = vmul.f32 %v596, %v860
  %v869 = vmul.f32 %v597, %v861
  %v870 = vmul.f32 %v598, %v862
  %v871 = vmul.f32 %v599, %v863
  %v872 = vmul.f32 %v600, %v864
  %v873 = vadd.f32 %v865, 1.0
  %v874 = vadd.f32 %v866, 1.0
  %v875 = vadd.f32 %v867, 1.0
  %v876 = vadd.f32 %v868, 1.0
  %v877 = vadd.f32 %v869, 1.0
  %v878 = vadd.f32 %v870, 1.0
  %v879 = vadd.f32 %v871, 1.0
  %v880 = vadd.f32 %v872, 1.0
  %v881 = vmul.f32 %v569, %v873
  %v882 = vmul.f32 %v570, %v874
  %v883 = vmul.f32 %v571, %v875
  %v884 = vmul.f32 %v572, %v876
  %v885 = vmul.f32 %v573, %v877
  %v886 = vmul.f32 %v574, %v878
  %v887 = vmul.f32 %v575, %v879
  %v888 = vmul.f32 %v576, %v880
  %v889 = vld [vmem:[%s3] sm:$0xff]
  %v890 = vld [vmem:[%s3 + $0x8] sm:$0xff]
  %v891 = vld [vmem:[%s3 + $0x10] sm:$0xff]
  %v892 = vld [vmem:[%s3 + $0x18] sm:$0xff]
  %v893 = vld [vmem:[%s3 + $0x20] sm:$0xff]
  %v894 = vld [vmem:[%s3 + $0x28] sm:$0xff]
  %v895 = vld [vmem:[%s3 + $0x30] sm:$0xff]
  %v896 = vld [vmem:[%s3 + $0x38] sm:$0xff]
  %v897 = vld [vmem:[%s3 + $0x40] sm:$0xff]
  %v898 = vld [vmem:[%s3 + $0x48] sm:$0xff]
  %v899 = vld [vmem:[%s3 + $0x50] sm:$0xff]
  %v900 = vld [vmem:[%s3 + $0x58] sm:$0xff]
  %v901 = vld [vmem:[%s3 + $0x60] sm:$0xff]
  %v902 = vld [vmem:[%s3 + $0x68] sm:$0xff]
  %v903 = vld [vmem:[%s3 + $0x70] sm:$0xff]
  %v904 = vld [vmem:[%s3 + $0x78] sm:$0xff]
  %v905 = vld [vmem:[%s3 + $0x80] sm:$0xff]
  %v906 = vld [vmem:[%s3 + $0x88] sm:$0xff]
  %v907 = vld [vmem:[%s3 + $0x90] sm:$0xff]
  %v908 = vld [vmem:[%s3 + $0x98] sm:$0xff]
  %v909 = vld [vmem:[%s3 + $0xa0] sm:$0xff]
  %v910 = vld [vmem:[%s3 + $0xa8] sm:$0xff]
  %v911 = vld [vmem:[%s3 + $0xb0] sm:$0xff]
  %v912 = vld [vmem:[%s3 + $0xb8] sm:$0xff]
  %v913 = vld [vmem:[%s3 + $0xc0] sm:$0xff]
  %v914 = vld [vmem:[%s3 + $0xc8] sm:$0xff]
  %v915 = vld [vmem:[%s3 + $0xd0] sm:$0xff]
  %v916 = vld [vmem:[%s3 + $0xd8] sm:$0xff]
  %v917 = vld [vmem:[%s3 + $0xe0] sm:$0xff]
  %v918 = vld [vmem:[%s3 + $0xe8] sm:$0xff]
  %v919 = vld [vmem:[%s3 + $0xf0] sm:$0xff]
  %v920 = vld [vmem:[%s3 + $0xf8] sm:$0xff]
  %v921 = vld [vmem:[%s3 + $0x100] sm:$0xff]
  %v922 = vld [vmem:[%s3 + $0x108] sm:$0xff]
  %v923 = vld [vmem:[%s3 + $0x110] sm:$0xff]
  %v924 = vld [vmem:[%s3 + $0x118] sm:$0xff]
  %v925 = vld [vmem:[%s3 + $0x120] sm:$0xff]
  %v926 = vld [vmem:[%s3 + $0x128] sm:$0xff]
  %v927 = vld [vmem:[%s3 + $0x130] sm:$0xff]
  %v928 = vld [vmem:[%s3 + $0x138] sm:$0xff]
  %v929 = vld [vmem:[%s3 + $0x140] sm:$0xff]
  %v930 = vld [vmem:[%s3 + $0x148] sm:$0xff]
  %v931 = vld [vmem:[%s3 + $0x150] sm:$0xff]
  %v932 = vld [vmem:[%s3 + $0x158] sm:$0xff]
  %v933 = vld [vmem:[%s3 + $0x160] sm:$0xff]
  %v934 = vld [vmem:[%s3 + $0x168] sm:$0xff]
  %v935 = vld [vmem:[%s3 + $0x170] sm:$0xff]
  %v936 = vld [vmem:[%s3 + $0x178] sm:$0xff]
  %v937 = vld [vmem:[%s3 + $0x180] sm:$0xff]
  %v938 = vld [vmem:[%s3 + $0x188] sm:$0xff]
  %v939 = vld [vmem:[%s3 + $0x190] sm:$0xff]
  %v940 = vld [vmem:[%s3 + $0x198] sm:$0xff]
  %v941 = vld [vmem:[%s3 + $0x1a0] sm:$0xff]
  %v942 = vld [vmem:[%s3 + $0x1a8] sm:$0xff]
  %v943 = vld [vmem:[%s3 + $0x1b0] sm:$0xff]
  %v944 = vld [vmem:[%s3 + $0x1b8] sm:$0xff]
  %v945 = vld [vmem:[%s3 + $0x1c0] sm:$0xff]
  %v946 = vld [vmem:[%s3 + $0x1c8] sm:$0xff]
  %v947 = vld [vmem:[%s3 + $0x1d0] sm:$0xff]
  %v948 = vld [vmem:[%s3 + $0x1d8] sm:$0xff]
  %v949 = vld [vmem:[%s3 + $0x1e0] sm:$0xff]
  %v950 = vld [vmem:[%s3 + $0x1e8] sm:$0xff]
  %v951 = vld [vmem:[%s3 + $0x1f0] sm:$0xff]
  %v952 = vld [vmem:[%s3 + $0x1f8] sm:$0xff]
  %v953 = vld [vmem:[%s3 + $0x200] sm:$0xff]
  %v954 = vld [vmem:[%s3 + $0x208] sm:$0xff]
  %v955 = vld [vmem:[%s3 + $0x210] sm:$0xff]
  %v956 = vld [vmem:[%s3 + $0x218] sm:$0xff]
  %v957 = vld [vmem:[%s3 + $0x220] sm:$0xff]
  %v958 = vld [vmem:[%s3 + $0x228] sm:$0xff]
  %v959 = vld [vmem:[%s3 + $0x230] sm:$0xff]
  %v960 = vld [vmem:[%s3 + $0x238] sm:$0xff]
  %v961 = vld [vmem:[%s3 + $0x240] sm:$0xff]
  %v962 = vld [vmem:[%s3 + $0x248] sm:$0xff]
  %v963 = vld [vmem:[%s3 + $0x250] sm:$0xff]
  %v964 = vld [vmem:[%s3 + $0x258] sm:$0xff]
  %v965 = vld [vmem:[%s3 + $0x260] sm:$0xff]
  %v966 = vld [vmem:[%s3 + $0x268] sm:$0xff]
  %v967 = vld [vmem:[%s3 + $0x270] sm:$0xff]
  %v968 = vld [vmem:[%s3 + $0x278] sm:$0xff]
  %v969 = vld [vmem:[%s3 + $0x280] sm:$0xff]
  %v970 = vld [vmem:[%s3 + $0x288] sm:$0xff]
  %v971 = vld [vmem:[%s3 + $0x290] sm:$0xff]
  %v972 = vld [vmem:[%s3 + $0x298] sm:$0xff]
  %v973 = vld [vmem:[%s3 + $0x2a0] sm:$0xff]
  %v974 = vld [vmem:[%s3 + $0x2a8] sm:$0xff]
  %v975 = vld [vmem:[%s3 + $0x2b0] sm:$0xff]
  %v976 = vld [vmem:[%s3 + $0x2b8] sm:$0xff]
  %v977 = vld [vmem:[%s3 + $0x2c0] sm:$0xff]
  %v978 = vld [vmem:[%s3 + $0x2c8] sm:$0xff]
  %v979 = vld [vmem:[%s3 + $0x2d0] sm:$0xff]
  %v980 = vld [vmem:[%s3 + $0x2d8] sm:$0xff]
  %v981 = vld [vmem:[%s3 + $0x2e0] sm:$0xff]
  %v982 = vld [vmem:[%s3 + $0x2e8] sm:$0xff]
  %v983 = vld [vmem:[%s3 + $0x2f0] sm:$0xff]
  %v984 = vld [vmem:[%s3 + $0x2f8] sm:$0xff]
  %v985 = vld [vmem:[%s3 + $0x300] sm:$0xff]
  %v986 = vld [vmem:[%s3 + $0x308] sm:$0xff]
  %v987 = vld [vmem:[%s3 + $0x310] sm:$0xff]
  %v988 = vld [vmem:[%s3 + $0x318] sm:$0xff]
  %v989 = vld [vmem:[%s3 + $0x320] sm:$0xff]
  %v990 = vld [vmem:[%s3 + $0x328] sm:$0xff]
  %v991 = vld [vmem:[%s3 + $0x330] sm:$0xff]
  %v992 = vld [vmem:[%s3 + $0x338] sm:$0xff]
  %v993 = vld [vmem:[%s3 + $0x340] sm:$0xff]
  %v994 = vld [vmem:[%s3 + $0x348] sm:$0xff]
  %v995 = vld [vmem:[%s3 + $0x350] sm:$0xff]
  %v996 = vld [vmem:[%s3 + $0x358] sm:$0xff]
  %v997 = vld [vmem:[%s3 + $0x360] sm:$0xff]
  %v998 = vld [vmem:[%s3 + $0x368] sm:$0xff]
  %v999 = vld [vmem:[%s3 + $0x370] sm:$0xff]
  %v1000 = vld [vmem:[%s3 + $0x378] sm:$0xff]
  %v1001 = vld [vmem:[%s3 + $0x380] sm:$0xff]
  %v1002 = vld [vmem:[%s3 + $0x388] sm:$0xff]
  %v1003 = vld [vmem:[%s3 + $0x390] sm:$0xff]
  %v1004 = vld [vmem:[%s3 + $0x398] sm:$0xff]
  %v1005 = vld [vmem:[%s3 + $0x3a0] sm:$0xff]
  %v1006 = vld [vmem:[%s3 + $0x3a8] sm:$0xff]
  %v1007 = vld [vmem:[%s3 + $0x3b0] sm:$0xff]
  %v1008 = vld [vmem:[%s3 + $0x3b8] sm:$0xff]
  %v1009 = vld [vmem:[%s3 + $0x3c0] sm:$0xff]
  %v1010 = vld [vmem:[%s3 + $0x3c8] sm:$0xff]
  %v1011 = vld [vmem:[%s3 + $0x3d0] sm:$0xff]
  %v1012 = vld [vmem:[%s3 + $0x3d8] sm:$0xff]
  %v1013 = vld [vmem:[%s3 + $0x3e0] sm:$0xff]
  %v1014 = vld [vmem:[%s3 + $0x3e8] sm:$0xff]
  %v1015 = vld [vmem:[%s3 + $0x3f0] sm:$0xff]
  %v1016 = vld [vmem:[%s3 + $0x3f8] sm:$0xff]
  %v1017 = vld [vmem:[#allocation2] sm:$0x1]
  %v1019 = vperm.slane %v1017, 0
  %1021 = vmatpush.msra.mxu0 %v904
  %1022 = vmatpush.msra.mxu0 %v903
  %1023 = vmatpush.msra.mxu0 %v902
  %1024 = vmatpush.msra.mxu0 %v901
  %1025 = vmatpush.msra.mxu0 %v900
  %1026 = vmatpush.msra.mxu0 %v899
  %1027 = vmatpush.msra.mxu0 %v898
  %1028 = vmatpush.msra.mxu0 %v897
  %1029 = vmatpush.msra.mxu0 %v896
  %1030 = vmatpush.msra.mxu0 %v895
  %1031 = vmatpush.msra.mxu0 %v894
  %1032 = vmatpush.msra.mxu0 %v893
  %1033 = vmatpush.msra.mxu0 %v892
  %1034 = vmatpush.msra.mxu0 %v891
  %1035 = vmatpush.msra.mxu0 %v890
  %1036 = vmatpush.msra.mxu0 %v889
  %1037 = vmatmul.f32.gmra.mxu0 %v881
  %v1038 = vpop.f32.mrf.mxu0
  %v1039 = vadd.f32 %v1019, %v1038
  %1040 = vdwg.mxu0
  %1041 = vmatpush.msra.mxu0 %v920
  %1042 = vmatpush.msra.mxu0 %v919
  %1043 = vmatpush.msra.mxu0 %v918
  %1044 = vmatpush.msra.mxu0 %v917
  %1045 = vmatpush.msra.mxu0 %v916
  %1046 = vmatpush.msra.mxu0 %v915
  %1047 = vmatpush.msra.mxu0 %v914
  %1048 = vmatpush.msra.mxu0 %v913
  %1049 = vmatpush.msra.mxu0 %v912
  %1050 = vmatpush.msra.mxu0 %v911
  %1051 = vmatpush.msra.mxu0 %v910
  %1052 = vmatpush.msra.mxu0 %v909
  %1053 = vmatpush.msra.mxu0 %v908
  %1054 = vmatpush.msra.mxu0 %v907
  %1055 = vmatpush.msra.mxu0 %v906
  %1056 = vmatpush.msra.mxu0 %v905
  %1057 = vmatmul.f32.gmra.mxu0 %v882
  %v1058 = vpop.f32.mrf.mxu0
  %v1059 = vadd.f32 %v1039, %v1058
  %1060 = vdwg.mxu0
  %1061 = vmatpush.msra.mxu0 %v936
  %1062 = vmatpush.msra.mxu0 %v935
  %1063 = vmatpush.msra.mxu0 %v934
  %1064 = vmatpush.msra.mxu0 %v933
  %1065 = vmatpush.msra.mxu0 %v932
  %1066 = vmatpush.msra.mxu0 %v931
  %1067 = vmatpush.msra.mxu0 %v930
  %1068 = vmatpush.msra.mxu0 %v929
  %1069 = vmatpush.msra.mxu0 %v928
  %1070 = vmatpush.msra.mxu0 %v927
  %1071 = vmatpush.msra.mxu0 %v926
  %1072 = vmatpush.msra.mxu0 %v925
  %1073 = vmatpush.msra.mxu0 %v924
  %1074 = vmatpush.msra.mxu0 %v923
  %1075 = vmatpush.msra.mxu0 %v922
  %1076 = vmatpush.msra.mxu0 %v921
  %1077 = vmatmul.f32.gmra.mxu0 %v883
  %v1078 = vpop.f32.mrf.mxu0
  %v1079 = vadd.f32 %v1059, %v1078
  %1080 = vdwg.mxu0
  %1081 = vmatpush.msra.mxu0 %v952
  %1082 = vmatpush.msra.mxu0 %v951
  %1083 = vmatpush.msra.mxu0 %v950
  %1084 = vmatpush.msra.mxu0 %v949
  %1085 = vmatpush.msra.mxu0 %v948
  %1086 = vmatpush.msra.mxu0 %v947
  %1087 = vmatpush.msra.mxu0 %v946
  %1088 = vmatpush.msra.mxu0 %v945
  %1089 = vmatpush.msra.mxu0 %v944
  %1090 = vmatpush.msra.mxu0 %v943
  %1091 = vmatpush.msra.mxu0 %v942
  %1092 = vmatpush.msra.mxu0 %v941
  %1093 = vmatpush.msra.mxu0 %v940
  %1094 = vmatpush.msra.mxu0 %v939
  %1095 = vmatpush.msra.mxu0 %v938
  %1096 = vmatpush.msra.mxu0 %v937
  %1097 = vmatmul.f32.gmra.mxu0 %v884
  %v1098 = vpop.f32.mrf.mxu0
  %v1099 = vadd.f32 %v1079, %v1098
  %1100 = vdwg.mxu0
  %1101 = vmatpush.msra.mxu0 %v968
  %1102 = vmatpush.msra.mxu0 %v967
  %1103 = vmatpush.msra.mxu0 %v966
  %1104 = vmatpush.msra.mxu0 %v965
  %1105 = vmatpush.msra.mxu0 %v964
  %1106 = vmatpush.msra.mxu0 %v963
  %1107 = vmatpush.msra.mxu0 %v962
  %1108 = vmatpush.msra.mxu0 %v961
  %1109 = vmatpush.msra.mxu0 %v960
  %1110 = vmatpush.msra.mxu0 %v959
  %1111 = vmatpush.msra.mxu0 %v958
  %1112 = vmatpush.msra.mxu0 %v957
  %1113 = vmatpush.msra.mxu0 %v956
  %1114 = vmatpush.msra.mxu0 %v955
  %1115 = vmatpush.msra.mxu0 %v954
  %1116 = vmatpush.msra.mxu0 %v953
  %1117 = vmatmul.f32.gmra.mxu0 %v885
  %v1118 = vpop.f32.mrf.mxu0
  %v1119 = vadd.f32 %v1099, %v1118
  %1120 = vdwg.mxu0
  %1121 = vmatpush.msra.mxu0 %v984
  %1122 = vmatpush.msra.mxu0 %v983
  %1123 = vmatpush.msra.mxu0 %v982
  %1124 = vmatpush.msra.mxu0 %v981
  %1125 = vmatpush.msra.mxu0 %v980
  %1126 = vmatpush.msra.mxu0 %v979
  %1127 = vmatpush.msra.mxu0 %v978
  %1128 = vmatpush.msra.mxu0 %v977
  %1129 = vmatpush.msra.mxu0 %v976
  %1130 = vmatpush.msra.mxu0 %v975
  %1131 = vmatpush.msra.mxu0 %v974
  %1132 = vmatpush.msra.mxu0 %v973
  %1133 = vmatpush.msra.mxu0 %v972
  %1134 = vmatpush.msra.mxu0 %v971
  %1135 = vmatpush.msra.mxu0 %v970
  %1136 = vmatpush.msra.mxu0 %v969
  %1137 = vmatmul.f32.gmra.mxu0 %v886
  %v1138 = vpop.f32.mrf.mxu0
  %v1139 = vadd.f32 %v1119, %v1138
  %1140 = vdwg.mxu0
  %1141 = vmatpush.msra.mxu0 %v1000
  %1142 = vmatpush.msra.mxu0 %v999
  %1143 = vmatpush.msra.mxu0 %v998
  %1144 = vmatpush.msra.mxu0 %v997
  %1145 = vmatpush.msra.mxu0 %v996
  %1146 = vmatpush.msra.mxu0 %v995
  %1147 = vmatpush.msra.mxu0 %v994
  %1148 = vmatpush.msra.mxu0 %v993
  %1149 = vmatpush.msra.mxu0 %v992
  %1150 = vmatpush.msra.mxu0 %v991
  %1151 = vmatpush.msra.mxu0 %v990
  %1152 = vmatpush.msra.mxu0 %v989
  %1153 = vmatpush.msra.mxu0 %v988
  %1154 = vmatpush.msra.mxu0 %v987
  %1155 = vmatpush.msra.mxu0 %v986
  %1156 = vmatpush.msra.mxu0 %v985
  %1157 = vmatmul.f32.gmra.mxu0 %v887
  %v1158 = vpop.f32.mrf.mxu0
  %v1159 = vadd.f32 %v1139, %v1158
  %1160 = vdwg.mxu0
  %1161 = vmatpush.msra.mxu0 %v1016
  %1162 = vmatpush.msra.mxu0 %v1015
  %1163 = vmatpush.msra.mxu0 %v1014
  %1164 = vmatpush.msra.mxu0 %v1013
  %1165 = vmatpush.msra.mxu0 %v1012
  %1166 = vmatpush.msra.mxu0 %v1011
  %1167 = vmatpush.msra.mxu0 %v1010
  %1168 = vmatpush.msra.mxu0 %v1009
  %1169 = vmatpush.msra.mxu0 %v1008
  %1170 = vmatpush.msra.mxu0 %v1007
  %1171 = vmatpush.msra.mxu0 %v1006
  %1172 = vmatpush.msra.mxu0 %v1005
  %1173 = vmatpush.msra.mxu0 %v1004
  %1174 = vmatpush.msra.mxu0 %v1003
  %1175 = vmatpush.msra.mxu0 %v1002
  %1176 = vmatpush.msra.mxu0 %v1001
  %1177 = vmatmul.f32.gmra.mxu0 %v888
  %v1178 = vpop.f32.mrf.mxu0
  %v1179 = vadd.f32 %v1159, %v1178
  %1180 = vdwg.mxu0
  %vm1181 = vcmask 1024
  %1182 = vst.msk [vmem:[%s5] sm:$0x3] %vm1181, %v1179
  // Predicated region
  $region22: #{cqa_forward.3} parent=0 // pred_check
    _
  $region23: #{cqa_forward.3} parent=0 // pred_check_branch
    %1184 = sbr.rel (0) target = $region25
  $region24: #{cqa_forward.3} parent=0 // pred_region
    _
  $region25: #{cqa_forward.3} parent=0 // pred_fallthru
    _
  // Predicated region
  $region26: #{cqa_forward.3} parent=0 // pred_check
    _
  $region27: #{cqa_forward.3} parent=0 // pred_check_branch
    %1186 = sbr.rel (0) target = $region29
  $region28: #{cqa_forward.3} parent=0 // pred_region
    _
  $region29: #{cqa_forward.3} parent=0 // pred_fallthru
    _

</llo_original>
